<compile_context>
chip_gen: v6e
topology: v6e:2x2x1
jax: 0.10.0
libtpu: 0.0.40
codegen_flags: <defaults>
</compile_context>

<pallas_src>
import functools

import jax
import jax.numpy as jnp
from jax import lax
from jax.experimental import pallas as pl
from jax.experimental.pallas import tpu as pltpu

KH = KW = 3
EPS = 1e-5


def _bn_relu(y, gamma_l, beta_l, cout, count):
    """Training-mode BatchNorm (two-pass batch stats) + ReLU, fused in-regs.

    y       : (rows, W*C) f32 activations, lane = w*C + c
    gamma_l : (1, W*C) per-lane gamma (channel value tiled over w)
    beta_l  : (1, W*C) per-lane beta
    The per-channel reduction over the W lane-groups is a log2(W) lane-roll
    doubling tree on the (1, W*C) row-sum (XLU, no MXU, exact in f32); the
    roll wraps mod W*C so every lane ends up holding its channel's total.
    """
    wc = y.shape[-1]
    inv = 1.0 / count

    def chan_sum(row):            # (1, W*C) -> per-channel total in every lane
        s = row
        k = cout
        while k < wc:             # requires W (= wc // cout) to be a power of 2
            s = s + pltpu.roll(s, k, axis=1)
            k *= 2
        return s

    mean_l = chan_sum(jnp.sum(y, axis=0, keepdims=True)) * inv
    d = y - mean_l
    var_l = chan_sum(jnp.sum(d * d, axis=0, keepdims=True)) * inv
    scale_l = gamma_l * lax.rsqrt(var_l + EPS)
    return jnp.maximum(d * scale_l + beta_l, 0.0)


def _conv3x3_rows(xrows, band_ref, not_top, not_bot):
    """3x3 'same' conv on lane-dense rows: 3 banded bf16 matmuls, f32 acc.

    xrows   : (N*H, W*Cin) f32, row r = (n, h), lane = w*Cin + i
    band_ref: (3, W*Cin, W*Cout) bf16 block-banded weights (one per kernel row)
    not_top : (N*H, 1) f32 mask, 0 where h == 0    ('same' zero padding above)
    not_bot : (N*H, 1) f32 mask, 0 where h == H-1  ('same' zero padding below)
    The dh = -1/+1 row taps come from sublane rolls (XLU) + masks: no staging
    scratch, no sublane-unaligned loads.
    """
    nh = xrows.shape[0]
    x_prev = pltpu.roll(xrows, 1, axis=0) * not_top        # row r-1 (or 0)
    x_next = pltpu.roll(xrows, nh - 1, axis=0) * not_bot   # row r+1 (or 0)
    acc = jnp.dot(x_prev.astype(jnp.bfloat16), band_ref[0],
                  preferred_element_type=jnp.float32)
    acc = acc + jnp.dot(xrows.astype(jnp.bfloat16), band_ref[1],
                        preferred_element_type=jnp.float32)
    # TODO(synk): on v7x, check the 3-tap accumulate stays in the MRB; if not,
    # concatenate the taps along K into one (nh, 3K) @ (3K, W*Cout) matmul.
    acc = acc + jnp.dot(x_next.astype(jnp.bfloat16), band_ref[2],
                        preferred_element_type=jnp.float32)
    return acc


def conv_block1_kernel(x_ref, w1b_ref, g1l_ref, bb1l_ref,
                       w2b_ref, g2l_ref, bb2l_ref, pick_ref,
                       out_ref, *, N, H, W, cin, cout):
    Ho = H // 2
    nh, nho = N * H, N * Ho
    count = float(N * H * W)

    # Image-boundary row masks (shared by both convs), built from iota.
    rows = lax.broadcasted_iota(jnp.int32, (nh, 1), 0)
    not_top = functools.reduce(
        jnp.logical_and, [rows != n * H for n in range(N)]).astype(jnp.float32)
    not_bot = functools.reduce(
        jnp.logical_and,
        [rows != n * H + (H - 1) for n in range(N)]).astype(jnp.float32)

    # ---- conv1 + BN1 + ReLU (conv bias dropped: cancelled by batch mean) ----
    y1 = _conv3x3_rows(x_ref[...], w1b_ref, not_top, not_bot)
    y1 = _bn_relu(y1, g1l_ref[...], bb1l_ref[...], cout, count)

    # ---- conv2 + BN2 + ReLU: y1 stays in registers, no VMEM staging ----
    y2 = _conv3x3_rows(y1, w2b_ref, not_top, not_bot)
    y2 = _bn_relu(y2, g2l_ref[...], bb2l_ref[...], cout, count)

    # ---- 2x2 / stride-2 max pool ----
    # Row-pair max on the VPU (partner row via sublane roll; valid on even
    # rows, which never cross an image boundary), one even-row pick matmul,
    # then a fused [even-col | odd-col] pick matmul so the store is a full
    # 128-lane unmasked vst.  The final column-pair max of the (N*Ho, 128)
    # result happens in the wrapper.
    pair = jnp.maximum(y2, pltpu.roll(y2, nh - 1, axis=0))
    ri = lax.broadcasted_iota(jnp.int32, (nho, nh), 0)
    ci = lax.broadcasted_iota(jnp.int32, (nho, nh), 1)
    even_pick = (ci == 2 * ri).astype(jnp.float32).astype(jnp.bfloat16)
    rowpick = jnp.dot(even_pick, pair.astype(jnp.bfloat16),
                      preferred_element_type=jnp.float32)       # (nho, W*cout)
    out_ref[...] = jnp.dot(rowpick.astype(jnp.bfloat16), pick_ref[...],
                           preferred_element_type=jnp.float32)  # (nho, 128)


def _band_weights(wgt, W):
    """OIHW (cout, cin, 3, 3) -> (3, W*cin, W*cout) bf16 block-banded matrices.

    band[dh, wi*cin + i, wo*cout + o] = wgt[o, i, dh, wi - wo + 1] when the
    horizontal tap lies inside the 3x3 window, else 0, so one matmul per
    kernel row applies all horizontal taps and the 'same' padding along W.
    """
    cout, cin = int(wgt.shape[0]), int(wgt.shape[1])
    wi = jnp.arange(W * cin) // cin
    ii = jnp.arange(W * cin) % cin
    wo = jnp.arange(W * cout) // cout
    oo = jnp.arange(W * cout) % cout
    dw = wi[:, None] - wo[None, :] + 1                   # (W*cin, W*cout)
    valid = (dw >= 0) & (dw < KW)
    dwc = jnp.clip(dw, 0, KW - 1)
    bands = [jnp.where(valid, wgt[oo[None, :], ii[:, None], dh, dwc], 0.0)
             for dh in range(KH)]
    return jnp.stack(bands, axis=0).astype(jnp.bfloat16)


def conv_block1(x_nchw, w1, b1, g1, bb1, w2, b2, g2, bb2):
    """Pallas implementation of ConvBlock1.forward (params in PyTorch shapes).

    b1/b2 are accepted for API parity but unused: a per-channel conv bias
    immediately before training-mode BatchNorm is exactly cancelled by the
    batch mean.
    """
    del b1, b2
    N, cin, H, W = x_nchw.shape
    cout = int(w1.shape[0])
    assert H % 2 == 0 and W % 2 == 0, "MaxPool2d(2) path assumes even H, W"
    assert (N * H) % 8 == 0, "row blocks assume N*H is a sublane multiple"
    assert (W & (W - 1)) == 0, "BN lane-roll reduction assumes W is a power of 2"
    Ho, Wo = H // 2, W // 2
    wci, wco = W * cin, W * cout
    half = Wo * cout                                   # 2*half == wco

    # NCHW -> lane-dense rows (N*H, W*cin): lane = w*cin + c.  No H padding —
    # the kernel builds the +/-1 row taps with rolls + boundary masks.
    # TODO(synk): fold this transpose into the kernel for non-toy sizes.
    x_rows = jnp.transpose(x_nchw, (0, 2, 3, 1)).astype(jnp.float32)
    x_rows = x_rows.reshape(N * H, wci)

    def lane_row(v):                # per-channel (C,) -> per-lane (1, W*C) f32
        return jnp.tile(v.astype(jnp.float32), W).reshape(1, wco)

    # Fused max-pool column-pick matrix [even-w | odd-w]: (wco, 2*half) 0/1.
    ch = jnp.arange(wco) % cout
    wcol = jnp.arange(wco) // cout
    cho = jnp.arange(half) % cout
    wout = jnp.arange(half) // cout
    same_c = ch[:, None] == cho[None, :]
    ce = same_c & (wcol[:, None] == 2 * wout[None, :])
    co = same_c & (wcol[:, None] == 2 * wout[None, :] + 1)
    pick = jnp.concatenate([ce, co], axis=1).astype(jnp.bfloat16)

    inputs = (x_rows,
              _band_weights(w1, W), lane_row(g1), lane_row(bb1),
              _band_weights(w2, W), lane_row(g2), lane_row(bb2),
              pick)

    def full_spec(a):
        nd = a.ndim
        return pl.BlockSpec(a.shape, lambda i, nd=nd: (0,) * nd)

    kernel = functools.partial(conv_block1_kernel,
                               N=N, H=H, W=W, cin=cin, cout=cout)

    out128 = pl.pallas_call(
        kernel,
        out_shape=jax.ShapeDtypeStruct((N * Ho, 2 * half), jnp.float32),
        grid=(1,),
        in_specs=[full_spec(a) for a in inputs],
        out_specs=pl.BlockSpec((N * Ho, 2 * half), lambda i: (0, 0)),
        compiler_params=pltpu.CompilerParams(
            dimension_semantics=("arbitrary",)),
    )(*inputs)

    # Final column-pair max of the full-width kernel output, then back to NCHW.
    pooled = jnp.maximum(out128[:, :half], out128[:, half:])
    out = pooled.reshape(N, Ho, Wo, cout)
    return jnp.transpose(out, (0, 3, 1, 2))


def reference(x_nchw, w1, b1, g1, bb1, w2, b2, g2, bb2):
    """Pure-JAX f32 reference with identical semantics (sanity check)."""
    x = jnp.transpose(x_nchw, (0, 2, 3, 1)).astype(jnp.float32)

    def conv(x, w, b):
        wh = jnp.transpose(w, (2, 3, 1, 0)).astype(jnp.float32)      # HWIO
        y = lax.conv_general_dilated(x, wh, (1, 1), 'SAME',
                                     dimension_numbers=('NHWC', 'HWIO', 'NHWC'))
        return y + b.reshape(1, 1, 1, -1)

    def bn_relu(x, g, b):
        mean = jnp.mean(x, axis=(0, 1, 2), keepdims=True)
        var = jnp.mean((x - mean) ** 2, axis=(0, 1, 2), keepdims=True)
        y = (x - mean) * lax.rsqrt(var + EPS) * g.reshape(1, 1, 1, -1) \
            + b.reshape(1, 1, 1, -1)
        return jnp.maximum(y, 0.0)

    y = bn_relu(conv(x, w1, b1), g1, bb1)
    y = bn_relu(conv(y, w2, b2), g2, bb2)
    y = lax.reduce_window(y, -jnp.inf, lax.max, (1, 2, 2, 1), (1, 2, 2, 1),
                          'VALID')
    return jnp.transpose(y, (0, 3, 1, 2))


if __name__ == "__main__":
    N, Cin, H, W = 2, 4, 16, 16      # in_dim=4
    Cout = 8                         # out_dim=8

    key = jax.random.PRNGKey(0)
    ks = jax.random.split(key, 9)
    x = jax.random.normal(ks[0], (N, Cin, H, W), jnp.float32)
    w1 = 0.2 * jax.random.normal(ks[1], (Cout, Cin, KH, KW), jnp.float32)
    b1 = 0.1 * jax.random.normal(ks[2], (Cout,), jnp.float32)
    g1 = 1.0 + 0.1 * jax.random.normal(ks[3], (Cout,), jnp.float32)
    bb1 = 0.1 * jax.random.normal(ks[4], (Cout,), jnp.float32)
    w2 = 0.2 * jax.random.normal(ks[5], (Cout, Cout, KH, KW), jnp.float32)
    b2 = 0.1 * jax.random.normal(ks[6], (Cout,), jnp.float32)
    g2 = 1.0 + 0.1 * jax.random.normal(ks[7], (Cout,), jnp.float32)
    bb2 = 0.1 * jax.random.normal(ks[8], (Cout,), jnp.float32)

    out = conv_block1(x, w1, b1, g1, bb1, w2, b2, g2, bb2)
    out = jax.block_until_ready(out)

    assert out.shape == (N, Cout, H // 2, W // 2), out.shape
    assert bool(jnp.all(jnp.isfinite(out)))

    ref = jax.block_until_ready(reference(x, w1, b1, g1, bb1, w2, b2, g2, bb2))
    # Tolerance sized for bf16 MXU operands (two chained bf16 convs + bf16 pool
    # picks, f32 accumulation) compared against the pure-f32 reference.
    max_err = float(jnp.max(jnp.abs(out - ref)))
    assert bool(jnp.allclose(out, ref, atol=3e-2, rtol=3e-2)), max_err

    print("KERNEL_OK")
</pallas_src>

<mosaic_0001>
module attributes {stable_mosaic.version = 11 : i64} {
  func.func @conv_block1_kernel(%arg0: i32, %arg1: memref<32x64xf32, #tpu.memory_space<vmem>>, %arg2: memref<3x64x128xbf16, #tpu.memory_space<vmem>>, %arg3: memref<1x128xf32, #tpu.memory_space<vmem>>, %arg4: memref<1x128xf32, #tpu.memory_space<vmem>>, %arg5: memref<3x128x128xbf16, #tpu.memory_space<vmem>>, %arg6: memref<1x128xf32, #tpu.memory_space<vmem>>, %arg7: memref<1x128xf32, #tpu.memory_space<vmem>>, %arg8: memref<128x128xbf16, #tpu.memory_space<vmem>>, %arg9: memref<16x128xf32, #tpu.memory_space<vmem>>) attributes {dimension_semantics = [#tpu.dimension_semantics<arbitrary>], iteration_bounds = array<i64: 1>, scalar_prefetch = 0 : i64, scratch_operands = 0 : i64, tpu.core_type = #tpu.core_type<tc>, window_params = [{pipeline_mode = #tpu.pipeline_mode<synchronous>, transform_indices = @transform_0, window_bounds = array<i64: 32, 64>}, {pipeline_mode = #tpu.pipeline_mode<synchronous>, transform_indices = @transform_1, window_bounds = array<i64: 3, 64, 128>}, {pipeline_mode = #tpu.pipeline_mode<synchronous>, transform_indices = @transform_2, window_bounds = array<i64: 1, 128>}, {pipeline_mode = #tpu.pipeline_mode<synchronous>, transform_indices = @transform_3, window_bounds = array<i64: 1, 128>}, {pipeline_mode = #tpu.pipeline_mode<synchronous>, transform_indices = @transform_4, window_bounds = array<i64: 3, 128, 128>}, {pipeline_mode = #tpu.pipeline_mode<synchronous>, transform_indices = @transform_5, window_bounds = array<i64: 1, 128>}, {pipeline_mode = #tpu.pipeline_mode<synchronous>, transform_indices = @transform_6, window_bounds = array<i64: 1, 128>}, {pipeline_mode = #tpu.pipeline_mode<synchronous>, transform_indices = @transform_7, window_bounds = array<i64: 128, 128>}, {pipeline_mode = #tpu.pipeline_mode<synchronous>, transform_indices = @transform_8, window_bounds = array<i64: 16, 128>}]} {
    %0 = tpu.iota {dimensions = array<i32: 0>} : vector<32x1xi32>
    %c0_i32 = arith.constant 0 : i32
    %1 = vector.broadcast %c0_i32 : i32 to vector<32x1xi32>
    %2 = arith.cmpi ne, %0, %1 : vector<32x1xi32>
    %c16_i32 = arith.constant 16 : i32
    %3 = vector.broadcast %c16_i32 : i32 to vector<32x1xi32>
    %4 = arith.cmpi ne, %0, %3 : vector<32x1xi32>
    %5 = arith.andi %2, %4 : vector<32x1xi1>
    %6 = arith.extui %5 : vector<32x1xi1> to vector<32x1xi32>
    %7 = arith.sitofp %6 : vector<32x1xi32> to vector<32x1xf32>
    %c15_i32 = arith.constant 15 : i32
    %8 = vector.broadcast %c15_i32 : i32 to vector<32x1xi32>
    %9 = arith.cmpi ne, %0, %8 : vector<32x1xi32>
    %c31_i32 = arith.constant 31 : i32
    %10 = vector.broadcast %c31_i32 : i32 to vector<32x1xi32>
    %11 = arith.cmpi ne, %0, %10 : vector<32x1xi32>
    %12 = arith.andi %9, %11 : vector<32x1xi1>
    %13 = arith.extui %12 : vector<32x1xi1> to vector<32x1xi32>
    %14 = arith.sitofp %13 : vector<32x1xi32> to vector<32x1xf32>
    %c0 = arith.constant 0 : index
    %c0_0 = arith.constant 0 : index
    %15 = vector.load %arg1[%c0, %c0_0] : memref<32x64xf32, #tpu.memory_space<vmem>>, vector<32x64xf32>
    %c1_i32 = arith.constant 1 : i32
    %16 = tpu.dynamic_rotate %15 by %c1_i32 dim 0 : vector<32x64xf32>, i32 -> vector<32x64xf32>
    %17 = vector.broadcast %7 : vector<32x1xf32> to vector<32x64xf32>
    %18 = arith.mulf %16, %17 : vector<32x64xf32>
    %c31_i32_1 = arith.constant 31 : i32
    %19 = tpu.dynamic_rotate %15 by %c31_i32_1 dim 0 : vector<32x64xf32>, i32 -> vector<32x64xf32>
    %20 = vector.broadcast %14 : vector<32x1xf32> to vector<32x64xf32>
    %21 = arith.mulf %19, %20 : vector<32x64xf32>
    %22 = arith.truncf %18 : vector<32x64xf32> to vector<32x64xbf16>
    %c0_2 = arith.constant 0 : index
    %c0_3 = arith.constant 0 : index
    %c0_4 = arith.constant 0 : index
    %23 = vector.load %arg2[%c0_2, %c0_3, %c0_4] : memref<3x64x128xbf16, #tpu.memory_space<vmem>>, vector<1x64x128xbf16>
    %24 = vector.shape_cast %23 : vector<1x64x128xbf16> to vector<64x128xbf16>
    %cst = arith.constant dense<0.000000e+00> : vector<32x128xf32>
    %25 = tpu.matmul %22, %24, %cst {dimension_numbers = #tpu.dot_dimension_numbers<[1], [0], [0], [1], [0, 0, 1, 1], [], []>} : vector<32x64xbf16>, vector<64x128xbf16>, vector<32x128xf32> -> vector<32x128xf32>
    %26 = arith.truncf %15 : vector<32x64xf32> to vector<32x64xbf16>
    %c1 = arith.constant 1 : index
    %c0_5 = arith.constant 0 : index
    %c0_6 = arith.constant 0 : index
    %27 = vector.load %arg2[%c1, %c0_5, %c0_6] : memref<3x64x128xbf16, #tpu.memory_space<vmem>>, vector<1x64x128xbf16>
    %28 = vector.shape_cast %27 : vector<1x64x128xbf16> to vector<64x128xbf16>
    %cst_7 = arith.constant dense<0.000000e+00> : vector<32x128xf32>
    %29 = tpu.matmul %26, %28, %cst_7 {dimension_numbers = #tpu.dot_dimension_numbers<[1], [0], [0], [1], [0, 0, 1, 1], [], []>} : vector<32x64xbf16>, vector<64x128xbf16>, vector<32x128xf32> -> vector<32x128xf32>
    %30 = arith.addf %25, %29 : vector<32x128xf32>
    %31 = arith.truncf %21 : vector<32x64xf32> to vector<32x64xbf16>
    %c2 = arith.constant 2 : index
    %c0_8 = arith.constant 0 : index
    %c0_9 = arith.constant 0 : index
    %32 = vector.load %arg2[%c2, %c0_8, %c0_9] : memref<3x64x128xbf16, #tpu.memory_space<vmem>>, vector<1x64x128xbf16>
    %33 = vector.shape_cast %32 : vector<1x64x128xbf16> to vector<64x128xbf16>
    %cst_10 = arith.constant dense<0.000000e+00> : vector<32x128xf32>
    %34 = tpu.matmul %31, %33, %cst_10 {dimension_numbers = #tpu.dot_dimension_numbers<[1], [0], [0], [1], [0, 0, 1, 1], [], []>} : vector<32x64xbf16>, vector<64x128xbf16>, vector<32x128xf32> -> vector<32x128xf32>
    %35 = arith.addf %30, %34 : vector<32x128xf32>
    %c0_11 = arith.constant 0 : index
    %c0_12 = arith.constant 0 : index
    %36 = vector.load %arg3[%c0_11, %c0_12] : memref<1x128xf32, #tpu.memory_space<vmem>>, vector<1x128xf32>
    %c0_13 = arith.constant 0 : index
    %c0_14 = arith.constant 0 : index
    %37 = vector.load %arg4[%c0_13, %c0_14] : memref<1x128xf32, #tpu.memory_space<vmem>>, vector<1x128xf32>
    %cst_15 = arith.constant dense<0.000000e+00> : vector<128xf32>
    %38 = vector.multi_reduction <add>, %35, %cst_15 [0] : vector<32x128xf32> to vector<128xf32>
    %39 = vector.shape_cast %38 : vector<128xf32> to vector<1x128xf32>
    %c8_i32 = arith.constant 8 : i32
    %40 = tpu.dynamic_rotate %39 by %c8_i32 dim 1 : vector<1x128xf32>, i32 -> vector<1x128xf32>
    %41 = arith.addf %39, %40 : vector<1x128xf32>
    %c16_i32_16 = arith.constant 16 : i32
    %42 = tpu.dynamic_rotate %41 by %c16_i32_16 dim 1 : vector<1x128xf32>, i32 -> vector<1x128xf32>
    %43 = arith.addf %41, %42 : vector<1x128xf32>
    %c32_i32 = arith.constant 32 : i32
    %44 = tpu.dynamic_rotate %43 by %c32_i32 dim 1 : vector<1x128xf32>, i32 -> vector<1x128xf32>
    %45 = arith.addf %43, %44 : vector<1x128xf32>
    %c64_i32 = arith.constant 64 : i32
    %46 = tpu.dynamic_rotate %45 by %c64_i32 dim 1 : vector<1x128xf32>, i32 -> vector<1x128xf32>
    %47 = arith.addf %45, %46 : vector<1x128xf32>
    %cst_17 = arith.constant 0.001953125 : f32
    %48 = vector.broadcast %cst_17 : f32 to vector<1x128xf32>
    %49 = arith.mulf %47, %48 : vector<1x128xf32>
    %50 = vector.broadcast %49 : vector<1x128xf32> to vector<32x128xf32>
    %51 = arith.subf %35, %50 : vector<32x128xf32>
    %52 = arith.mulf %51, %51 : vector<32x128xf32>
    %cst_18 = arith.constant dense<0.000000e+00> : vector<128xf32>
    %53 = vector.multi_reduction <add>, %52, %cst_18 [0] : vector<32x128xf32> to vector<128xf32>
    %54 = vector.shape_cast %53 : vector<128xf32> to vector<1x128xf32>
    %c8_i32_19 = arith.constant 8 : i32
    %55 = tpu.dynamic_rotate %54 by %c8_i32_19 dim 1 : vector<1x128xf32>, i32 -> vector<1x128xf32>
    %56 = arith.addf %54, %55 : vector<1x128xf32>
    %c16_i32_20 = arith.constant 16 : i32
    %57 = tpu.dynamic_rotate %56 by %c16_i32_20 dim 1 : vector<1x128xf32>, i32 -> vector<1x128xf32>
    %58 = arith.addf %56, %57 : vector<1x128xf32>
    %c32_i32_21 = arith.constant 32 : i32
    %59 = tpu.dynamic_rotate %58 by %c32_i32_21 dim 1 : vector<1x128xf32>, i32 -> vector<1x128xf32>
    %60 = arith.addf %58, %59 : vector<1x128xf32>
    %c64_i32_22 = arith.constant 64 : i32
    %61 = tpu.dynamic_rotate %60 by %c64_i32_22 dim 1 : vector<1x128xf32>, i32 -> vector<1x128xf32>
    %62 = arith.addf %60, %61 : vector<1x128xf32>
    %cst_23 = arith.constant 0.001953125 : f32
    %63 = vector.broadcast %cst_23 : f32 to vector<1x128xf32>
    %64 = arith.mulf %62, %63 : vector<1x128xf32>
    %cst_24 = arith.constant 9.99999974E-6 : f32
    %65 = vector.broadcast %cst_24 : f32 to vector<1x128xf32>
    %66 = arith.addf %64, %65 : vector<1x128xf32>
    %67 = math.rsqrt %66 : vector<1x128xf32>
    %68 = arith.mulf %36, %67 : vector<1x128xf32>
    %69 = vector.broadcast %68 : vector<1x128xf32> to vector<32x128xf32>
    %70 = arith.mulf %51, %69 : vector<32x128xf32>
    %71 = vector.broadcast %37 : vector<1x128xf32> to vector<32x128xf32>
    %72 = arith.addf %70, %71 : vector<32x128xf32>
    %cst_25 = arith.constant 0.000000e+00 : f32
    %73 = vector.broadcast %cst_25 : f32 to vector<32x128xf32>
    %74 = arith.maximumf %72, %73 : vector<32x128xf32>
    %c1_i32_26 = arith.constant 1 : i32
    %75 = tpu.dynamic_rotate %74 by %c1_i32_26 dim 0 : vector<32x128xf32>, i32 -> vector<32x128xf32>
    %76 = vector.broadcast %7 : vector<32x1xf32> to vector<32x128xf32>
    %77 = arith.mulf %75, %76 : vector<32x128xf32>
    %c31_i32_27 = arith.constant 31 : i32
    %78 = tpu.dynamic_rotate %74 by %c31_i32_27 dim 0 : vector<32x128xf32>, i32 -> vector<32x128xf32>
    %79 = vector.broadcast %14 : vector<32x1xf32> to vector<32x128xf32>
    %80 = arith.mulf %78, %79 : vector<32x128xf32>
    %81 = arith.truncf %77 : vector<32x128xf32> to vector<32x128xbf16>
    %c0_28 = arith.constant 0 : index
    %c0_29 = arith.constant 0 : index
    %c0_30 = arith.constant 0 : index
    %82 = vector.load %arg5[%c0_28, %c0_29, %c0_30] : memref<3x128x128xbf16, #tpu.memory_space<vmem>>, vector<1x128x128xbf16>
    %83 = vector.shape_cast %82 : vector<1x128x128xbf16> to vector<128x128xbf16>
    %cst_31 = arith.constant dense<0.000000e+00> : vector<32x128xf32>
    %84 = tpu.matmul %81, %83, %cst_31 {dimension_numbers = #tpu.dot_dimension_numbers<[1], [0], [0], [1], [0, 0, 1, 1], [], []>} : vector<32x128xbf16>, vector<128x128xbf16>, vector<32x128xf32> -> vector<32x128xf32>
    %85 = arith.truncf %74 : vector<32x128xf32> to vector<32x128xbf16>
    %c1_32 = arith.constant 1 : index
    %c0_33 = arith.constant 0 : index
    %c0_34 = arith.constant 0 : index
    %86 = vector.load %arg5[%c1_32, %c0_33, %c0_34] : memref<3x128x128xbf16, #tpu.memory_space<vmem>>, vector<1x128x128xbf16>
    %87 = vector.shape_cast %86 : vector<1x128x128xbf16> to vector<128x128xbf16>
    %cst_35 = arith.constant dense<0.000000e+00> : vector<32x128xf32>
    %88 = tpu.matmul %85, %87, %cst_35 {dimension_numbers = #tpu.dot_dimension_numbers<[1], [0], [0], [1], [0, 0, 1, 1], [], []>} : vector<32x128xbf16>, vector<128x128xbf16>, vector<32x128xf32> -> vector<32x128xf32>
    %89 = arith.addf %84, %88 : vector<32x128xf32>
    %90 = arith.truncf %80 : vector<32x128xf32> to vector<32x128xbf16>
    %c2_36 = arith.constant 2 : index
    %c0_37 = arith.constant 0 : index
    %c0_38 = arith.constant 0 : index
    %91 = vector.load %arg5[%c2_36, %c0_37, %c0_38] : memref<3x128x128xbf16, #tpu.memory_space<vmem>>, vector<1x128x128xbf16>
    %92 = vector.shape_cast %91 : vector<1x128x128xbf16> to vector<128x128xbf16>
    %cst_39 = arith.constant dense<0.000000e+00> : vector<32x128xf32>
    %93 = tpu.matmul %90, %92, %cst_39 {dimension_numbers = #tpu.dot_dimension_numbers<[1], [0], [0], [1], [0, 0, 1, 1], [], []>} : vector<32x128xbf16>, vector<128x128xbf16>, vector<32x128xf32> -> vector<32x128xf32>
    %94 = arith.addf %89, %93 : vector<32x128xf32>
    %c0_40 = arith.constant 0 : index
    %c0_41 = arith.constant 0 : index
    %95 = vector.load %arg6[%c0_40, %c0_41] : memref<1x128xf32, #tpu.memory_space<vmem>>, vector<1x128xf32>
    %c0_42 = arith.constant 0 : index
    %c0_43 = arith.constant 0 : index
    %96 = vector.load %arg7[%c0_42, %c0_43] : memref<1x128xf32, #tpu.memory_space<vmem>>, vector<1x128xf32>
    %cst_44 = arith.constant dense<0.000000e+00> : vector<128xf32>
    %97 = vector.multi_reduction <add>, %94, %cst_44 [0] : vector<32x128xf32> to vector<128xf32>
    %98 = vector.shape_cast %97 : vector<128xf32> to vector<1x128xf32>
    %c8_i32_45 = arith.constant 8 : i32
    %99 = tpu.dynamic_rotate %98 by %c8_i32_45 dim 1 : vector<1x128xf32>, i32 -> vector<1x128xf32>
    %100 = arith.addf %98, %99 : vector<1x128xf32>
    %c16_i32_46 = arith.constant 16 : i32
    %101 = tpu.dynamic_rotate %100 by %c16_i32_46 dim 1 : vector<1x128xf32>, i32 -> vector<1x128xf32>
    %102 = arith.addf %100, %101 : vector<1x128xf32>
    %c32_i32_47 = arith.constant 32 : i32
    %103 = tpu.dynamic_rotate %102 by %c32_i32_47 dim 1 : vector<1x128xf32>, i32 -> vector<1x128xf32>
    %104 = arith.addf %102, %103 : vector<1x128xf32>
    %c64_i32_48 = arith.constant 64 : i32
    %105 = tpu.dynamic_rotate %104 by %c64_i32_48 dim 1 : vector<1x128xf32>, i32 -> vector<1x128xf32>
    %106 = arith.addf %104, %105 : vector<1x128xf32>
    %cst_49 = arith.constant 0.001953125 : f32
    %107 = vector.broadcast %cst_49 : f32 to vector<1x128xf32>
    %108 = arith.mulf %106, %107 : vector<1x128xf32>
    %109 = vector.broadcast %108 : vector<1x128xf32> to vector<32x128xf32>
    %110 = arith.subf %94, %109 : vector<32x128xf32>
    %111 = arith.mulf %110, %110 : vector<32x128xf32>
    %cst_50 = arith.constant dense<0.000000e+00> : vector<128xf32>
    %112 = vector.multi_reduction <add>, %111, %cst_50 [0] : vector<32x128xf32> to vector<128xf32>
    %113 = vector.shape_cast %112 : vector<128xf32> to vector<1x128xf32>
    %c8_i32_51 = arith.constant 8 : i32
    %114 = tpu.dynamic_rotate %113 by %c8_i32_51 dim 1 : vector<1x128xf32>, i32 -> vector<1x128xf32>
    %115 = arith.addf %113, %114 : vector<1x128xf32>
    %c16_i32_52 = arith.constant 16 : i32
    %116 = tpu.dynamic_rotate %115 by %c16_i32_52 dim 1 : vector<1x128xf32>, i32 -> vector<1x128xf32>
    %117 = arith.addf %115, %116 : vector<1x128xf32>
    %c32_i32_53 = arith.constant 32 : i32
    %118 = tpu.dynamic_rotate %117 by %c32_i32_53 dim 1 : vector<1x128xf32>, i32 -> vector<1x128xf32>
    %119 = arith.addf %117, %118 : vector<1x128xf32>
    %c64_i32_54 = arith.constant 64 : i32
    %120 = tpu.dynamic_rotate %119 by %c64_i32_54 dim 1 : vector<1x128xf32>, i32 -> vector<1x128xf32>
    %121 = arith.addf %119, %120 : vector<1x128xf32>
    %cst_55 = arith.constant 0.001953125 : f32
    %122 = vector.broadcast %cst_55 : f32 to vector<1x128xf32>
    %123 = arith.mulf %121, %122 : vector<1x128xf32>
    %cst_56 = arith.constant 9.99999974E-6 : f32
    %124 = vector.broadcast %cst_56 : f32 to vector<1x128xf32>
    %125 = arith.addf %123, %124 : vector<1x128xf32>
    %126 = math.rsqrt %125 : vector<1x128xf32>
    %127 = arith.mulf %95, %126 : vector<1x128xf32>
    %128 = vector.broadcast %127 : vector<1x128xf32> to vector<32x128xf32>
    %129 = arith.mulf %110, %128 : vector<32x128xf32>
    %130 = vector.broadcast %96 : vector<1x128xf32> to vector<32x128xf32>
    %131 = arith.addf %129, %130 : vector<32x128xf32>
    %cst_57 = arith.constant 0.000000e+00 : f32
    %132 = vector.broadcast %cst_57 : f32 to vector<32x128xf32>
    %133 = arith.maximumf %131, %132 : vector<32x128xf32>
    %c31_i32_58 = arith.constant 31 : i32
    %134 = tpu.dynamic_rotate %133 by %c31_i32_58 dim 0 : vector<32x128xf32>, i32 -> vector<32x128xf32>
    %135 = arith.maximumf %133, %134 : vector<32x128xf32>
    %136 = tpu.iota {dimensions = array<i32: 0>} : vector<16x32xi32>
    %137 = tpu.iota {dimensions = array<i32: 1>} : vector<16x32xi32>
    %c2_i32 = arith.constant 2 : i32
    %138 = vector.broadcast %c2_i32 : i32 to vector<16x32xi32>
    %139 = arith.muli %138, %136 : vector<16x32xi32>
    %140 = arith.cmpi eq, %137, %139 : vector<16x32xi32>
    %141 = arith.extui %140 : vector<16x32xi1> to vector<16x32xi32>
    %142 = arith.sitofp %141 : vector<16x32xi32> to vector<16x32xf32>
    %143 = arith.truncf %142 : vector<16x32xf32> to vector<16x32xbf16>
    %144 = arith.truncf %135 : vector<32x128xf32> to vector<32x128xbf16>
    %cst_59 = arith.constant dense<0.000000e+00> : vector<16x128xf32>
    %145 = tpu.matmul %143, %144, %cst_59 {dimension_numbers = #tpu.dot_dimension_numbers<[1], [0], [0], [1], [0, 0, 1, 1], [], []>} : vector<16x32xbf16>, vector<32x128xbf16>, vector<16x128xf32> -> vector<16x128xf32>
    %146 = arith.truncf %145 : vector<16x128xf32> to vector<16x128xbf16>
    %c0_60 = arith.constant 0 : index
    %c0_61 = arith.constant 0 : index
    %147 = vector.load %arg8[%c0_60, %c0_61] : memref<128x128xbf16, #tpu.memory_space<vmem>>, vector<128x128xbf16>
    %cst_62 = arith.constant dense<0.000000e+00> : vector<16x128xf32>
    %148 = tpu.matmul %146, %147, %cst_62 {dimension_numbers = #tpu.dot_dimension_numbers<[1], [0], [0], [1], [0, 0, 1, 1], [], []>} : vector<16x128xbf16>, vector<128x128xbf16>, vector<16x128xf32> -> vector<16x128xf32>
    %c0_63 = arith.constant 0 : index
    %c0_64 = arith.constant 0 : index
    %149 = vector.load %arg9[%c0_63, %c0_64] : memref<16x128xf32, #tpu.memory_space<vmem>>, vector<16x128xf32>
    tpu.vector_store %arg9[%c0_63, %c0_64], %148 {strides = array<i32>} : memref<16x128xf32, #tpu.memory_space<vmem>>, vector<16x128xf32>,
    return
  }
  func.func @transform_0(%arg0: i32) -> (i32, i32) {
    %c0_i32 = arith.constant 0 : i32
    %c0_i32_0 = arith.constant 0 : i32
    %c0_i32_1 = arith.constant 0 : i32
    return %c0_i32, %c0_i32_0 : i32, i32
  }
  func.func @transform_1(%arg0: i32) -> (i32, i32, i32) {
    %c0_i32 = arith.constant 0 : i32
    %c0_i32_0 = arith.constant 0 : i32
    %c0_i32_1 = arith.constant 0 : i32
    %c0_i32_2 = arith.constant 0 : i32
    return %c0_i32, %c0_i32_0, %c0_i32_1 : i32, i32, i32
  }
  func.func @transform_2(%arg0: i32) -> (i32, i32) {
    %c0_i32 = arith.constant 0 : i32
    %c0_i32_0 = arith.constant 0 : i32
    %c0_i32_1 = arith.constant 0 : i32
    return %c0_i32, %c0_i32_0 : i32, i32
  }
  func.func @transform_3(%arg0: i32) -> (i32, i32) {
    %c0_i32 = arith.constant 0 : i32
    %c0_i32_0 = arith.constant 0 : i32
    %c0_i32_1 = arith.constant 0 : i32
    return %c0_i32, %c0_i32_0 : i32, i32
  }
  func.func @transform_4(%arg0: i32) -> (i32, i32, i32) {
    %c0_i32 = arith.constant 0 : i32
    %c0_i32_0 = arith.constant 0 : i32
    %c0_i32_1 = arith.constant 0 : i32
    %c0_i32_2 = arith.constant 0 : i32
    return %c0_i32, %c0_i32_0, %c0_i32_1 : i32, i32, i32
  }
  func.func @transform_5(%arg0: i32) -> (i32, i32) {
    %c0_i32 = arith.constant 0 : i32
    %c0_i32_0 = arith.constant 0 : i32
    %c0_i32_1 = arith.constant 0 : i32
    return %c0_i32, %c0_i32_0 : i32, i32
  }
  func.func @transform_6(%arg0: i32) -> (i32, i32) {
    %c0_i32 = arith.constant 0 : i32
    %c0_i32_0 = arith.constant 0 : i32
    %c0_i32_1 = arith.constant 0 : i32
    return %c0_i32, %c0_i32_0 : i32, i32
  }
  func.func @transform_7(%arg0: i32) -> (i32, i32) {
    %c0_i32 = arith.constant 0 : i32
    %c0_i32_0 = arith.constant 0 : i32
    %c0_i32_1 = arith.constant 0 : i32
    return %c0_i32, %c0_i32_0 : i32, i32
  }
  func.func @transform_8(%arg0: i32) -> (i32, i32) {
    %c0_i32 = arith.constant 0 : i32
    %c0_i32_0 = arith.constant 0 : i32
    %c0_i32_1 = arith.constant 0 : i32
    return %c0_i32, %c0_i32_0 : i32, i32
  }
}

</mosaic_0001>

<llo_original>
// kernel: tpu_custom_call.1
$region0: #{tpu_custom_call.1}
  #allocation0 [shape = 'u32[]', space=smem, size = 0x4, offset = 0x4, fixed_abs, tag = 'smem constant byte address 0x4 - core index']
  #allocation1 [shape = 'u32[144,128]{1,0:T(1,128)}', space=vmem, size = 0x12000, scoped, tag = 'internal scratch']
  %s0 = inlined_call_operand.hbm [shape: f32[32,64], index: 0, kind: input, shape index: {}]
  %s1 = inlined_call_operand.hbm [shape: bf16[3,64,128], index: 1, kind: input, shape index: {}]
  %s2 = inlined_call_operand.vmem [shape: f32[1,128], index: 2, kind: input, shape index: {}]
  %s3 = inlined_call_operand.vmem [shape: f32[1,128], index: 3, kind: input, shape index: {}]
  %s4 = inlined_call_operand.hbm [shape: bf16[3,128,128], index: 4, kind: input, shape index: {}]
  %s5 = inlined_call_operand.vmem [shape: f32[1,128], index: 5, kind: input, shape index: {}]
  %s6 = inlined_call_operand.vmem [shape: f32[1,128], index: 6, kind: input, shape index: {}]
  %s7 = inlined_call_operand.hbm [shape: bf16[128,128], index: 7, kind: input, shape index: {}]
  %s8 = inlined_call_operand.hbm [shape: f32[16,128], index: 8, kind: output, shape index: {}]
  %s9 = sld [smem:[#allocation0]]
  $region58: #{tpu_custom_call.1} parent=0
    _
  %s11 = ssub.s32 1, %s9
  %s12 = scalar_select 0, %s11, %s9
  $region1: #{tpu_custom_call.1} parent=0
    #allocation2 [shape = 'u8[16384]{0}', space=vmem, size = 0x4000, scoped, tag = 'input window, operand 0, single buffered']
    #allocation3 [shape = 's32[1]{0}', space=sflag, size = 0x4, scoped, tag = 'scoped memory for tpu_custom_call.1']
    #allocation4 [shape = 's32[1]{0}', space=sflag, size = 0x4, scoped, tag = 'scoped memory for tpu_custom_call.1']
    #allocation5 [shape = 'u8[49152]{0}', space=vmem, size = 0xc000, scoped, tag = 'input window, operand 1, single buffered']
    #allocation6 [shape = 's32[1]{0}', space=sflag, size = 0x4, scoped, tag = 'scoped memory for tpu_custom_call.1']
    #allocation7 [shape = 'u8[98304]{0}', space=vmem, size = 0x18000, scoped, tag = 'input window, operand 4, single buffered']
    #allocation8 [shape = 'u8[32768]{0}', space=vmem, size = 0x8000, scoped, tag = 'input window, operand 7, single buffered']
    #allocation9 [shape = 's32[1]{0}', space=sflag, size = 0x4, scoped, tag = 'scoped memory for tpu_custom_call.1']
    #allocation10 [shape = 'u8[8192]{0}', space=vmem, size = 0x2000, scoped, tag = 'output window, operand 0, single buffered']
    %13 = vsyncpa [#allocation3], 0
    %14 = vsyncpa [#allocation6], 0
    %15 = vsyncpa [#allocation9], 0
    %16 = vsyncpa [#allocation4], 0
    // Predicated region
    $region2: #{tpu_custom_call.1} parent=1 // pred_check
      _
    $region3: #{tpu_custom_call.1} parent=1 // pred_check_branch
      %18 = sbr.rel (0) target = $region5
    $region4: #{tpu_custom_call.1} parent=1 // pred_region
      %s20 = ssub.s32 512, 512
      %21 = vsyncadd [#allocation3], %s20
      %s22 = sshll.u32 [#allocation2], 4
      %s23 = int_to_ptr.vmem [resolvable:$true] %s22
      %28 = dma.hbm_to_vmem [thread:$0]  %s0, 512, %s23, [#allocation3], 128, 128, 8
    $region5: #{tpu_custom_call.1} parent=1 // pred_fallthru
      _
    // Predicated region
    $region6: #{tpu_custom_call.1} parent=1 // pred_check
      _
    $region7: #{tpu_custom_call.1} parent=1 // pred_check_branch
      %30 = sbr.rel (0) target = $region9
    $region8: #{tpu_custom_call.1} parent=1 // pred_region
      %s32 = ssub.s32 1536, 1536
      %33 = vsyncadd [#allocation6], %s32
      %s34 = sshll.u32 [#allocation5], 4
      %s35 = int_to_ptr.vmem [resolvable:$true] %s34
      %40 = dma.hbm_to_vmem [thread:$0]  %s1, 1536, %s35, [#allocation6], 64, 64, 4
    $region9: #{tpu_custom_call.1} parent=1 // pred_fallthru
      _
    // Predicated region
    $region10: #{tpu_custom_call.1} parent=1 // pred_check
      _
    $region11: #{tpu_custom_call.1} parent=1 // pred_check_branch
      %42 = sbr.rel (0) target = $region13
    $region12: #{tpu_custom_call.1} parent=1 // pred_region
      _
    $region13: #{tpu_custom_call.1} parent=1 // pred_fallthru
      _
    // Predicated region
    $region14: #{tpu_custom_call.1} parent=1 // pred_check
      _
    $region15: #{tpu_custom_call.1} parent=1 // pred_check_branch
      %44 = sbr.rel (0) target = $region17
    $region16: #{tpu_custom_call.1} parent=1 // pred_region
      _
    $region17: #{tpu_custom_call.1} parent=1 // pred_fallthru
      _
    // Predicated region
    $region18: #{tpu_custom_call.1} parent=1 // pred_check
      _
    $region19: #{tpu_custom_call.1} parent=1 // pred_check_branch
      %46 = sbr.rel (0) target = $region21
    $region20: #{tpu_custom_call.1} parent=1 // pred_region
      %s48 = ssub.s32 3072, 3072
      %49 = vsyncadd [#allocation6], %s48
      %s50 = sshll.u32 [#allocation7], 4
      %s51 = int_to_ptr.vmem [resolvable:$true] %s50
      %56 = dma.hbm_to_vmem [thread:$0]  %s4, 3072, %s51, [#allocation6], 64, 64, 4
    $region21: #{tpu_custom_call.1} parent=1 // pred_fallthru
      _
    // Predicated region
    $region22: #{tpu_custom_call.1} parent=1 // pred_check
      _
    $region23: #{tpu_custom_call.1} parent=1 // pred_check_branch
      %58 = sbr.rel (0) target = $region25
    $region24: #{tpu_custom_call.1} parent=1 // pred_region
      _
    $region25: #{tpu_custom_call.1} parent=1 // pred_fallthru
      _
    // Predicated region
    $region26: #{tpu_custom_call.1} parent=1 // pred_check
      _
    $region27: #{tpu_custom_call.1} parent=1 // pred_check_branch
      %60 = sbr.rel (0) target = $region29
    $region28: #{tpu_custom_call.1} parent=1 // pred_region
      _
    $region29: #{tpu_custom_call.1} parent=1 // pred_fallthru
      _
    // Predicated region
    $region30: #{tpu_custom_call.1} parent=1 // pred_check
      _
    $region31: #{tpu_custom_call.1} parent=1 // pred_check_branch
      %62 = sbr.rel (0) target = $region33
    $region32: #{tpu_custom_call.1} parent=1 // pred_region
      %s64 = ssub.s32 1024, 1024
      %65 = vsyncadd [#allocation9], %s64
      %s66 = sshll.u32 [#allocation8], 4
      %s67 = int_to_ptr.vmem [resolvable:$true] %s66
      %72 = dma.hbm_to_vmem [thread:$0]  %s7, 1024, %s67, [#allocation9], 64, 64, 4
    $region33: #{tpu_custom_call.1} parent=1 // pred_fallthru
      _
    // Predicated region
    $region34: #{tpu_custom_call.1} parent=1 // pred_check
      _
    $region35: #{tpu_custom_call.1} parent=1 // pred_check_branch
      %74 = sbr.rel (0) target = $region37
    $region36: #{tpu_custom_call.1} parent=1 // pred_region
      %75 = dma.done [#allocation3], 512
    $region37: #{tpu_custom_call.1} parent=1 // pred_fallthru
      _
    // Predicated region
    $region38: #{tpu_custom_call.1} parent=1 // pred_check
      _
    $region39: #{tpu_custom_call.1} parent=1 // pred_check_branch
      %77 = sbr.rel (0) target = $region41
    $region40: #{tpu_custom_call.1} parent=1 // pred_region
      %78 = dma.done [#allocation6], 1536
    $region41: #{tpu_custom_call.1} parent=1 // pred_fallthru
      _
    // Predicated region
    $region42: #{tpu_custom_call.1} parent=1 // pred_check
      _
    $region43: #{tpu_custom_call.1} parent=1 // pred_check_branch
      %80 = sbr.rel (0) target = $region45
    $region44: #{tpu_custom_call.1} parent=1 // pred_region
      %81 = dma.done [#allocation6], 3072
    $region45: #{tpu_custom_call.1} parent=1 // pred_fallthru
      _
    // Predicated region
    $region46: #{tpu_custom_call.1} parent=1 // pred_check
      _
    $region47: #{tpu_custom_call.1} parent=1 // pred_check_branch
      %83 = sbr.rel (0) target = $region49
    $region48: #{tpu_custom_call.1} parent=1 // pred_region
      %84 = dma.done [#allocation9], 1024
    $region49: #{tpu_custom_call.1} parent=1 // pred_fallthru
      _
    %v86 = vlaneseq
    %v87 = vshrl.u32 %v86, 7
    %v88 = vadd.s32 %v87, 8
    %v89 = vadd.s32 %v87, 16
    %v90 = vadd.s32 %v87, 24
    %vm91 = vcmp.ne.s32.totalorder %v87, 0
    %vm92 = vcmp.ne.s32.totalorder %v88, 0
    %vm93 = vcmp.ne.s32.totalorder %v89, 0
    %vm94 = vcmp.ne.s32.totalorder %v90, 0
    %vm95 = vcmp.ne.s32.totalorder %v87, 16
    %vm96 = vcmp.ne.s32.totalorder %v88, 16
    %vm97 = vcmp.ne.s32.totalorder %v89, 16
    %vm98 = vcmp.ne.s32.totalorder %v90, 16
    %vm99 = vmand %vm91, %vm95
    %vm100 = vmand %vm92, %vm96
    %vm101 = vmand %vm93, %vm97
    %vm102 = vmand %vm94, %vm98
    %v103 = vsel %vm99, 1, 0
    %v104 = vsel %vm100, 1, 0
    %v105 = vsel %vm101, 1, 0
    %v106 = vsel %vm102, 1, 0
    %v107 = vcvt.s32.f32 %v103
    %v108 = vcvt.s32.f32 %v104
    %v109 = vcvt.s32.f32 %v105
    %v110 = vcvt.s32.f32 %v106
    %vm111 = vcmp.ne.s32.totalorder %v87, 15
    %vm112 = vcmp.ne.s32.totalorder %v88, 15
    %vm113 = vcmp.ne.s32.totalorder %v89, 15
    %vm114 = vcmp.ne.s32.totalorder %v90, 15
    %vm115 = vcmp.ne.s32.totalorder %v87, 31
    %vm116 = vcmp.ne.s32.totalorder %v88, 31
    %vm117 = vcmp.ne.s32.totalorder %v89, 31
    %vm118 = vcmp.ne.s32.totalorder %v90, 31
    %vm119 = vmand %vm111, %vm115
    %vm120 = vmand %vm112, %vm116
    %vm121 = vmand %vm113, %vm117
    %vm122 = vmand %vm114, %vm118
    %v123 = vsel %vm119, 1, 0
    %v124 = vsel %vm120, 1, 0
    %v125 = vsel %vm121, 1, 0
    %v126 = vsel %vm122, 1, 0
    %v127 = vcvt.s32.f32 %v123
    %v128 = vcvt.s32.f32 %v124
    %v129 = vcvt.s32.f32 %v125
    %v130 = vcvt.s32.f32 %v126
    %v131 = vld [vmem:[#allocation2] sm:$0xff]
    %v132 = vld [vmem:[#allocation2 + $0x8] sm:$0xff]
    %v133 = vld [vmem:[#allocation2 + $0x10] sm:$0xff]
    %v134 = vld [vmem:[#allocation2 + $0x18] sm:$0xff]
    %v135 = vrot.slane %v131, 7
    %v136 = vrot.slane %v132, 7
    %v137 = vrot.slane %v133, 7
    %v138 = vrot.slane %v134, 7
    %vm139 = vcmp.lt.s32.totalorder %v87, 1
    %v140 = vsel %vm139, %v137, %v138
    %v141 = vsel %vm139, %v136, %v137
    %v142 = vsel %vm139, %v135, %v136
    %v143 = vsel %vm139, %v138, %v135
    %v144 = vmul.f32 %v143, %v107
    %v145 = vmul.f32 %v142, %v108
    %v146 = vmul.f32 %v141, %v109
    %v147 = vmul.f32 %v140, %v110
    %v148 = vrot.slane %v131, 1
    %v149 = vrot.slane %v132, 1
    %v150 = vrot.slane %v133, 1
    %v151 = vrot.slane %v134, 1
    %vm152 = vcmp.lt.s32.totalorder %v87, 7
    %v153 = vsel %vm152, %v150, %v151
    %v154 = vsel %vm152, %v149, %v150
    %v155 = vsel %vm152, %v148, %v149
    %v156 = vsel %vm152, %v151, %v148
    %v157 = vmul.f32 %v155, %v127
    %v158 = vmul.f32 %v154, %v128
    %v159 = vmul.f32 %v153, %v129
    %v160 = vmul.f32 %v156, %v130
    %v161 = vpack.c.bf16 %v145, %v144
    %v162 = vpack.c.bf16 %v147, %v146
    %v163 = vld [vmem:[#allocation5] sm:$0xf]
    %v164 = vld [vmem:[#allocation5 + $0x4] sm:$0xf]
    %v165 = vld [vmem:[#allocation5 + $0x8] sm:$0xf]
    %v166 = vld [vmem:[#allocation5 + $0xc] sm:$0xf]
    %v167 = vld [vmem:[#allocation5 + $0x10] sm:$0xf]
    %v168 = vld [vmem:[#allocation5 + $0x14] sm:$0xf]
    %v169 = vld [vmem:[#allocation5 + $0x18] sm:$0xf]
    %v170 = vld [vmem:[#allocation5 + $0x1c] sm:$0xf]
    %v171 = vpack.c.bf16 %v132, %v131
    %v172 = vpack.c.bf16 %v134, %v133
    %s173 = scalar_lea.vmem [#allocation5], 32
    %v174 = vld [vmem:[%s173] sm:$0xf]
    %v175 = vld [vmem:[%s173 + $0x4] sm:$0xf]
    %v176 = vld [vmem:[%s173 + $0x8] sm:$0xf]
    %v177 = vld [vmem:[%s173 + $0xc] sm:$0xf]
    %v178 = vld [vmem:[%s173 + $0x10] sm:$0xf]
    %v179 = vld [vmem:[%s173 + $0x14] sm:$0xf]
    %v180 = vld [vmem:[%s173 + $0x18] sm:$0xf]
    %v181 = vld [vmem:[%s173 + $0x1c] sm:$0xf]
    %v190 = vunpack.c.l.b16 %v174
    %v191 = vunpack.c.l.b16 %v175
    %v192 = vunpack.c.l.b16 %v176
    %v193 = vunpack.c.l.b16 %v177
    %v194 = vunpack.c.l.b16 %v178
    %v195 = vunpack.c.l.b16 %v179
    %v196 = vunpack.c.l.b16 %v180
    %v197 = vunpack.c.l.b16 %v181
    %v198 = vpack.c.b16 %v191, %v190
    %v199 = vpack.c.b16 %v193, %v192
    %v200 = vpack.c.b16 %v195, %v194
    %v201 = vpack.c.b16 %v197, %v196
    %vm206 = vcmask 523264
    %v208 = vsel %vm206, %v171, 0
    %v211 = vsel %vm206, %v172, 0
    %213 = vmatprep.subr.bf16.mxu0 0
    %214 = vmatpush1.bf16.msra.mxu0 0
    %215 = vmatprep.subr.bf16.mxu0 0
    %216 = vmatpush1.bf16.msra.mxu0 0
    %217 = vmatprep.subr.bf16.mxu0 0
    %218 = vmatpush1.bf16.msra.mxu0 0
    %219 = vmatprep.subr.bf16.mxu0 0
    %220 = vmatpush1.bf16.msra.mxu0 0
    %221 = vmatprep.subr.bf16.mxu0 0
    %222 = vmatpush1.bf16.msra.mxu0 %v201
    %223 = vmatprep.subr.bf16.mxu0 0
    %224 = vmatpush1.bf16.msra.mxu0 %v200
    %225 = vmatprep.subr.bf16.mxu0 0
    %226 = vmatpush1.bf16.msra.mxu0 %v199
    %227 = vmatprep.subr.bf16.mxu0 0
    %228 = vmatpush1.bf16.msra.mxu0 %v198
    %229 = vmatprep.subr.bf16.mxu0 0
    %230 = vmatpush2.bf16.msra.mxu0 0
    %231 = vmatprep.subr.bf16.mxu0 0
    %232 = vmatpush2.bf16.msra.mxu0 0
    %233 = vmatprep.subr.bf16.mxu0 0
    %234 = vmatpush2.bf16.msra.mxu0 0
    %235 = vmatprep.subr.bf16.mxu0 0
    %236 = vmatpush2.bf16.msra.mxu0 0
    %237 = vmatprep.subr.bf16.mxu0 0
    %238 = vmatpush2.bf16.msra.mxu0 0
    %239 = vmatprep.subr.bf16.mxu0 0
    %240 = vmatpush2.bf16.msra.mxu0 0
    %241 = vmatprep.subr.bf16.mxu0 0
    %242 = vmatpush2.bf16.msra.mxu0 0
    %243 = vmatprep.subr.bf16.mxu0 0
    %244 = vmatpush2.bf16.msra.mxu0 0
    %245 = vmatprep.mubr.bf16.mxu0 0
    %246 = vmatmul.mubr.bf16.gmra.mxu0 %v208
    %v247 = vpop.f32.mrf.mxu0
    %v248 = vadd.f32 0.0, %v247
    %v249 = vpop.f32.mrf.mxu0
    %v250 = vpop.f32.mrf.mxu0
    %v251 = vadd.f32 0.0, %v250
    %v252 = vpop.f32.mrf.mxu0
    %253 = vmatprep.mubr.bf16.mxu0 0
    %254 = vmatmul.mubr.bf16.gmra.mxu0 %v211
    %v255 = vpop.f32.mrf.mxu0
    %v256 = vadd.f32 0.0, %v255
    %v257 = vpop.f32.mrf.mxu0
    %v258 = vpop.f32.mrf.mxu0
    %v259 = vadd.f32 0.0, %v258
    %v260 = vpop.f32.mrf.mxu0
    %261 = vdwg.mxu0
    %v270 = vunpack.c.l.b16 %v163
    %v271 = vunpack.c.l.b16 %v164
    %v272 = vunpack.c.l.b16 %v165
    %v273 = vunpack.c.l.b16 %v166
    %v274 = vunpack.c.l.b16 %v167
    %v275 = vunpack.c.l.b16 %v168
    %v276 = vunpack.c.l.b16 %v169
    %v277 = vunpack.c.l.b16 %v170
    %v278 = vpack.c.b16 %v271, %v270
    %v279 = vpack.c.b16 %v273, %v272
    %v280 = vpack.c.b16 %v275, %v274
    %v281 = vpack.c.b16 %v277, %v276
    %v287 = vsel %vm206, %v161, 0
    %v290 = vsel %vm206, %v162, 0
    %292 = vmatprep.subr.bf16.mxu0 0
    %293 = vmatpush1.bf16.msra.mxu0 0
    %294 = vmatprep.subr.bf16.mxu0 0
    %295 = vmatpush1.bf16.msra.mxu0 0
    %296 = vmatprep.subr.bf16.mxu0 0
    %297 = vmatpush1.bf16.msra.mxu0 0
    %298 = vmatprep.subr.bf16.mxu0 0
    %299 = vmatpush1.bf16.msra.mxu0 0
    %300 = vmatprep.subr.bf16.mxu0 0
    %301 = vmatpush1.bf16.msra.mxu0 %v281
    %302 = vmatprep.subr.bf16.mxu0 0
    %303 = vmatpush1.bf16.msra.mxu0 %v280
    %304 = vmatprep.subr.bf16.mxu0 0
    %305 = vmatpush1.bf16.msra.mxu0 %v279
    %306 = vmatprep.subr.bf16.mxu0 0
    %307 = vmatpush1.bf16.msra.mxu0 %v278
    %308 = vmatprep.subr.bf16.mxu0 0
    %309 = vmatpush2.bf16.msra.mxu0 0
    %310 = vmatprep.subr.bf16.mxu0 0
    %311 = vmatpush2.bf16.msra.mxu0 0
    %312 = vmatprep.subr.bf16.mxu0 0
    %313 = vmatpush2.bf16.msra.mxu0 0
    %314 = vmatprep.subr.bf16.mxu0 0
    %315 = vmatpush2.bf16.msra.mxu0 0
    %316 = vmatprep.subr.bf16.mxu0 0
    %317 = vmatpush2.bf16.msra.mxu0 0
    %318 = vmatprep.subr.bf16.mxu0 0
    %319 = vmatpush2.bf16.msra.mxu0 0
    %320 = vmatprep.subr.bf16.mxu0 0
    %321 = vmatpush2.bf16.msra.mxu0 0
    %322 = vmatprep.subr.bf16.mxu0 0
    %323 = vmatpush2.bf16.msra.mxu0 0
    %324 = vmatprep.mubr.bf16.mxu0 0
    %325 = vmatmul.mubr.bf16.gmra.mxu0 %v287
    %v326 = vpop.f32.mrf.mxu0
    %v327 = vadd.f32 %v248, %v326
    %v328 = vpop.f32.mrf.mxu0
    %v329 = vpop.f32.mrf.mxu0
    %v330 = vadd.f32 %v251, %v329
    %v331 = vpop.f32.mrf.mxu0
    %332 = vmatprep.mubr.bf16.mxu0 0
    %333 = vmatmul.mubr.bf16.gmra.mxu0 %v290
    %v334 = vpop.f32.mrf.mxu0
    %v335 = vadd.f32 %v256, %v334
    %v336 = vpop.f32.mrf.mxu0
    %v337 = vpop.f32.mrf.mxu0
    %v338 = vadd.f32 %v259, %v337
    %v339 = vpop.f32.mrf.mxu0
    %340 = vdwg.mxu0
    %v341 = vpack.c.bf16 %v158, %v157
    %v342 = vpack.c.bf16 %v160, %v159
    %s343 = scalar_lea.vmem [#allocation5], 64
    %v344 = vld [vmem:[%s343] sm:$0xf]
    %v345 = vld [vmem:[%s343 + $0x4] sm:$0xf]
    %v346 = vld [vmem:[%s343 + $0x8] sm:$0xf]
    %v347 = vld [vmem:[%s343 + $0xc] sm:$0xf]
    %v348 = vld [vmem:[%s343 + $0x10] sm:$0xf]
    %v349 = vld [vmem:[%s343 + $0x14] sm:$0xf]
    %v350 = vld [vmem:[%s343 + $0x18] sm:$0xf]
    %v351 = vld [vmem:[%s343 + $0x1c] sm:$0xf]
    %v360 = vunpack.c.l.b16 %v344
    %v361 = vunpack.c.l.b16 %v345
    %v362 = vunpack.c.l.b16 %v346
    %v363 = vunpack.c.l.b16 %v347
    %v364 = vunpack.c.l.b16 %v348
    %v365 = vunpack.c.l.b16 %v349
    %v366 = vunpack.c.l.b16 %v350
    %v367 = vunpack.c.l.b16 %v351
    %v368 = vpack.c.b16 %v361, %v360
    %v369 = vpack.c.b16 %v363, %v362
    %v370 = vpack.c.b16 %v365, %v364
    %v371 = vpack.c.b16 %v367, %v366
    %v377 = vsel %vm206, %v341, 0
    %v380 = vsel %vm206, %v342, 0
    %382 = vmatprep.subr.bf16.mxu0 0
    %383 = vmatpush1.bf16.msra.mxu0 0
    %384 = vmatprep.subr.bf16.mxu0 0
    %385 = vmatpush1.bf16.msra.mxu0 0
    %386 = vmatprep.subr.bf16.mxu0 0
    %387 = vmatpush1.bf16.msra.mxu0 0
    %388 = vmatprep.subr.bf16.mxu0 0
    %389 = vmatpush1.bf16.msra.mxu0 0
    %390 = vmatprep.subr.bf16.mxu0 0
    %391 = vmatpush1.bf16.msra.mxu0 %v371
    %392 = vmatprep.subr.bf16.mxu0 0
    %393 = vmatpush1.bf16.msra.mxu0 %v370
    %394 = vmatprep.subr.bf16.mxu0 0
    %395 = vmatpush1.bf16.msra.mxu0 %v369
    %396 = vmatprep.subr.bf16.mxu0 0
    %397 = vmatpush1.bf16.msra.mxu0 %v368
    %398 = vmatprep.subr.bf16.mxu0 0
    %399 = vmatpush2.bf16.msra.mxu0 0
    %400 = vmatprep.subr.bf16.mxu0 0
    %401 = vmatpush2.bf16.msra.mxu0 0
    %402 = vmatprep.subr.bf16.mxu0 0
    %403 = vmatpush2.bf16.msra.mxu0 0
    %404 = vmatprep.subr.bf16.mxu0 0
    %405 = vmatpush2.bf16.msra.mxu0 0
    %406 = vmatprep.subr.bf16.mxu0 0
    %407 = vmatpush2.bf16.msra.mxu0 0
    %408 = vmatprep.subr.bf16.mxu0 0
    %409 = vmatpush2.bf16.msra.mxu0 0
    %410 = vmatprep.subr.bf16.mxu0 0
    %411 = vmatpush2.bf16.msra.mxu0 0
    %412 = vmatprep.subr.bf16.mxu0 0
    %413 = vmatpush2.bf16.msra.mxu0 0
    %414 = vmatprep.mubr.bf16.mxu0 0
    %415 = vmatmul.mubr.bf16.gmra.mxu0 %v377
    %v416 = vpop.f32.mrf.mxu0
    %v417 = vadd.f32 0.0, %v416
    %v418 = vpop.f32.mrf.mxu0
    %v419 = vpop.f32.mrf.mxu0
    %v420 = vadd.f32 0.0, %v419
    %v421 = vpop.f32.mrf.mxu0
    %422 = vmatprep.mubr.bf16.mxu0 0
    %423 = vmatmul.mubr.bf16.gmra.mxu0 %v380
    %v424 = vpop.f32.mrf.mxu0
    %v425 = vadd.f32 0.0, %v424
    %v426 = vpop.f32.mrf.mxu0
    %v427 = vpop.f32.mrf.mxu0
    %v428 = vadd.f32 0.0, %v427
    %v429 = vpop.f32.mrf.mxu0
    %430 = vdwg.mxu0
    %v431 = vadd.f32 %v327, %v417
    %v432 = vadd.f32 %v330, %v420
    %v433 = vadd.f32 %v335, %v425
    %v434 = vadd.f32 %v338, %v428
    %v435 = vld [vmem:[%s2] sm:$0x1]
    %v436 = vld [vmem:[%s3] sm:$0x1]
    %v437 = vadd.f32 %v431, %v432
    %v438 = vadd.f32 %v437, %v433
    %v439 = vadd.f32 %v438, %v434
    %v440 = vrot.slane %v439, 4
    %v441 = vadd.f32 %v439, %v440
    %v442 = vrot.slane %v441, 2
    %v443 = vadd.f32 %v441, %v442
    %v444 = vrot.slane %v443, 1
    %v445 = vadd.f32 %v443, %v444
    %446 = vrot.lane.b32.xlu0 %v445, 8
    %v447 = vpop.permute.xlu0 %446
    %v448 = vadd.f32 %v445, %v447
    %449 = vrot.lane.b32.xlu0 %v448, 16
    %v450 = vpop.permute.xlu0 %449
    %v451 = vadd.f32 %v448, %v450
    %452 = vrot.lane.b32.xlu0 %v451, 32
    %v453 = vpop.permute.xlu0 %452
    %v454 = vadd.f32 %v451, %v453
    %455 = vrot.lane.b32.xlu0 %v454, 64
    %v456 = vpop.permute.xlu0 %455
    %v457 = vadd.f32 %v454, %v456
    %v458 = vmul.f32 %v457, 0.001953125
    %v459 = vlaneseq
    %v460 = vshrl.u32 %v459, 7
    %v461 = vsub.s32 0, %v460
    %v462 = vrot.slane %v458, %v461
    %v463 = vsub.f32 %v431, %v462
    %v464 = vsub.f32 %v432, %v462
    %v465 = vsub.f32 %v433, %v462
    %v466 = vsub.f32 %v434, %v462
    %v467 = vmul.f32 %v463, %v463
    %v468 = vmul.f32 %v464, %v464
    %v469 = vmul.f32 %v465, %v465
    %v470 = vmul.f32 %v466, %v466
    %v471 = vadd.f32 %v467, %v468
    %v472 = vadd.f32 %v471, %v469
    %v473 = vadd.f32 %v472, %v470
    %v474 = vrot.slane %v473, 4
    %v475 = vadd.f32 %v473, %v474
    %v476 = vrot.slane %v475, 2
    %v477 = vadd.f32 %v475, %v476
    %v478 = vrot.slane %v477, 1
    %v479 = vadd.f32 %v477, %v478
    %480 = vrot.lane.b32.xlu0 %v479, 8
    %v481 = vpop.permute.xlu0 %480
    %v482 = vadd.f32 %v479, %v481
    %483 = vrot.lane.b32.xlu0 %v482, 16
    %v484 = vpop.permute.xlu0 %483
    %v485 = vadd.f32 %v482, %v484
    %486 = vrot.lane.b32.xlu0 %v485, 32
    %v487 = vpop.permute.xlu0 %486
    %v488 = vadd.f32 %v485, %v487
    %489 = vrot.lane.b32.xlu0 %v488, 64
    %v490 = vpop.permute.xlu0 %489
    %v491 = vadd.f32 %v488, %v490
    %v492 = vmul.f32 %v491, 0.001953125
    %v493 = vadd.f32 %v492, 1e-05
    %v494 = vrsqrt.pop %v493
    %v495 = vmul.f32 %v435, %v494
    %v497 = vlaneseq
    %v498 = vshrl.u32 %v497, 7
    %v499 = vsub.s32 0, %v498
    %v500 = vrot.slane %v495, %v499
    %v502 = vmul.f32 %v463, %v500
    %v503 = vmul.f32 %v464, %v500
    %v504 = vmul.f32 %v465, %v500
    %v505 = vmul.f32 %v466, %v500
    %v507 = vlaneseq
    %v508 = vshrl.u32 %v507, 7
    %v509 = vsub.s32 0, %v508
    %v510 = vrot.slane %v436, %v509
    %v512 = vadd.f32 %v502, %v510
    %v513 = vadd.f32 %v503, %v510
    %v514 = vadd.f32 %v504, %v510
    %v515 = vadd.f32 %v505, %v510
    %v516 = vmax.f32 %v512, 0.0
    %v517 = vmax.f32 %v513, 0.0
    %v518 = vmax.f32 %v514, 0.0
    %v519 = vmax.f32 %v515, 0.0
    %v520 = vrot.slane %v516, 7
    %v521 = vrot.slane %v517, 7
    %v522 = vrot.slane %v518, 7
    %v523 = vrot.slane %v519, 7
    %v524 = vsel %vm139, %v522, %v523
    %v525 = vsel %vm139, %v521, %v522
    %v526 = vsel %vm139, %v520, %v521
    %v527 = vsel %vm139, %v523, %v520
    %v528 = vmul.f32 %v527, %v107
    %v529 = vmul.f32 %v526, %v108
    %v530 = vmul.f32 %v525, %v109
    %v531 = vmul.f32 %v524, %v110
    %v532 = vrot.slane %v516, 1
    %v533 = vrot.slane %v517, 1
    %v534 = vrot.slane %v518, 1
    %v535 = vrot.slane %v519, 1
    %v536 = vsel %vm152, %v534, %v535
    %v537 = vsel %vm152, %v533, %v534
    %v538 = vsel %vm152, %v532, %v533
    %v539 = vsel %vm152, %v535, %v532
    %v540 = vmul.f32 %v538, %v127
    %v541 = vmul.f32 %v537, %v128
    %v542 = vmul.f32 %v536, %v129
    %v543 = vmul.f32 %v539, %v130
    %v544 = vpack.c.bf16 %v529, %v528
    %v545 = vpack.c.bf16 %v531, %v530
    %v546 = vld [vmem:[#allocation7] sm:$0xf]
    %v547 = vld [vmem:[#allocation7 + $0x4] sm:$0xf]
    %v548 = vld [vmem:[#allocation7 + $0x8] sm:$0xf]
    %v549 = vld [vmem:[#allocation7 + $0xc] sm:$0xf]
    %v550 = vld [vmem:[#allocation7 + $0x10] sm:$0xf]
    %v551 = vld [vmem:[#allocation7 + $0x14] sm:$0xf]
    %v552 = vld [vmem:[#allocation7 + $0x18] sm:$0xf]
    %v553 = vld [vmem:[#allocation7 + $0x1c] sm:$0xf]
    %v554 = vld [vmem:[#allocation7 + $0x20] sm:$0xf]
    %v555 = vld [vmem:[#allocation7 + $0x24] sm:$0xf]
    %v556 = vld [vmem:[#allocation7 + $0x28] sm:$0xf]
    %v557 = vld [vmem:[#allocation7 + $0x2c] sm:$0xf]
    %v558 = vld [vmem:[#allocation7 + $0x30] sm:$0xf]
    %v559 = vld [vmem:[#allocation7 + $0x34] sm:$0xf]
    %v560 = vld [vmem:[#allocation7 + $0x38] sm:$0xf]
    %v561 = vld [vmem:[#allocation7 + $0x3c] sm:$0xf]
    %v562 = vpack.c.bf16 %v517, %v516
    %v563 = vpack.c.bf16 %v519, %v518
    %s564 = scalar_lea.vmem [#allocation7], 64
    %v565 = vld [vmem:[%s564] sm:$0xf]
    %v566 = vld [vmem:[%s564 + $0x4] sm:$0xf]
    %v567 = vld [vmem:[%s564 + $0x8] sm:$0xf]
    %v568 = vld [vmem:[%s564 + $0xc] sm:$0xf]
    %v569 = vld [vmem:[%s564 + $0x10] sm:$0xf]
    %v570 = vld [vmem:[%s564 + $0x14] sm:$0xf]
    %v571 = vld [vmem:[%s564 + $0x18] sm:$0xf]
    %v572 = vld [vmem:[%s564 + $0x1c] sm:$0xf]
    %v573 = vld [vmem:[%s564 + $0x20] sm:$0xf]
    %v574 = vld [vmem:[%s564 + $0x24] sm:$0xf]
    %v575 = vld [vmem:[%s564 + $0x28] sm:$0xf]
    %v576 = vld [vmem:[%s564 + $0x2c] sm:$0xf]
    %v577 = vld [vmem:[%s564 + $0x30] sm:$0xf]
    %v578 = vld [vmem:[%s564 + $0x34] sm:$0xf]
    %v579 = vld [vmem:[%s564 + $0x38] sm:$0xf]
    %v580 = vld [vmem:[%s564 + $0x3c] sm:$0xf]
    %v597 = vunpack.c.l.b16 %v565
    %v598 = vunpack.c.l.b16 %v566
    %v599 = vunpack.c.l.b16 %v567
    %v600 = vunpack.c.l.b16 %v568
    %v601 = vunpack.c.l.b16 %v569
    %v602 = vunpack.c.l.b16 %v570
    %v603 = vunpack.c.l.b16 %v571
    %v604 = vunpack.c.l.b16 %v572
    %v605 = vunpack.c.l.b16 %v573
    %v606 = vunpack.c.l.b16 %v574
    %v607 = vunpack.c.l.b16 %v575
    %v608 = vunpack.c.l.b16 %v576
    %v609 = vunpack.c.l.b16 %v577
    %v610 = vunpack.c.l.b16 %v578
    %v611 = vunpack.c.l.b16 %v579
    %v612 = vunpack.c.l.b16 %v580
    %v613 = vpack.c.b16 %v598, %v597
    %v614 = vpack.c.b16 %v600, %v599
    %v615 = vpack.c.b16 %v602, %v601
    %v616 = vpack.c.b16 %v604, %v603
    %v617 = vpack.c.b16 %v606, %v605
    %v618 = vpack.c.b16 %v608, %v607
    %v619 = vpack.c.b16 %v610, %v609
    %v620 = vpack.c.b16 %v612, %v611
    %629 = vmatprep.subr.bf16.mxu0 0
    %630 = vmatpush1.bf16.msra.mxu0 %v620
    %631 = vmatprep.subr.bf16.mxu0 0
    %632 = vmatpush1.bf16.msra.mxu0 %v619
    %633 = vmatprep.subr.bf16.mxu0 0
    %634 = vmatpush1.bf16.msra.mxu0 %v618
    %635 = vmatprep.subr.bf16.mxu0 0
    %636 = vmatpush1.bf16.msra.mxu0 %v617
    %637 = vmatprep.subr.bf16.mxu0 0
    %638 = vmatpush1.bf16.msra.mxu0 %v616
    %639 = vmatprep.subr.bf16.mxu0 0
    %640 = vmatpush1.bf16.msra.mxu0 %v615
    %641 = vmatprep.subr.bf16.mxu0 0
    %642 = vmatpush1.bf16.msra.mxu0 %v614
    %643 = vmatprep.subr.bf16.mxu0 0
    %644 = vmatpush1.bf16.msra.mxu0 %v613
    %645 = vmatprep.subr.bf16.mxu0 0
    %646 = vmatpush2.bf16.msra.mxu0 0
    %647 = vmatprep.subr.bf16.mxu0 0
    %648 = vmatpush2.bf16.msra.mxu0 0
    %649 = vmatprep.subr.bf16.mxu0 0
    %650 = vmatpush2.bf16.msra.mxu0 0
    %651 = vmatprep.subr.bf16.mxu0 0
    %652 = vmatpush2.bf16.msra.mxu0 0
    %653 = vmatprep.subr.bf16.mxu0 0
    %654 = vmatpush2.bf16.msra.mxu0 0
    %655 = vmatprep.subr.bf16.mxu0 0
    %656 = vmatpush2.bf16.msra.mxu0 0
    %657 = vmatprep.subr.bf16.mxu0 0
    %658 = vmatpush2.bf16.msra.mxu0 0
    %659 = vmatprep.subr.bf16.mxu0 0
    %660 = vmatpush2.bf16.msra.mxu0 0
    %661 = vmatprep.mubr.bf16.mxu0 0
    %662 = vmatmul.mubr.bf16.gmra.mxu0 %v562
    %v663 = vpop.f32.mrf.mxu0
    %v664 = vadd.f32 0.0, %v663
    %v665 = vpop.f32.mrf.mxu0
    %v666 = vpop.f32.mrf.mxu0
    %v667 = vadd.f32 0.0, %v666
    %v668 = vpop.f32.mrf.mxu0
    %669 = vmatprep.mubr.bf16.mxu0 0
    %670 = vmatmul.mubr.bf16.gmra.mxu0 %v563
    %v671 = vpop.f32.mrf.mxu0
    %v672 = vadd.f32 0.0, %v671
    %v673 = vpop.f32.mrf.mxu0
    %v674 = vpop.f32.mrf.mxu0
    %v675 = vadd.f32 0.0, %v674
    %v676 = vpop.f32.mrf.mxu0
    %677 = vdwg.mxu0
    %v694 = vunpack.c.l.b16 %v546
    %v695 = vunpack.c.l.b16 %v547
    %v696 = vunpack.c.l.b16 %v548
    %v697 = vunpack.c.l.b16 %v549
    %v698 = vunpack.c.l.b16 %v550
    %v699 = vunpack.c.l.b16 %v551
    %v700 = vunpack.c.l.b16 %v552
    %v701 = vunpack.c.l.b16 %v553
    %v702 = vunpack.c.l.b16 %v554
    %v703 = vunpack.c.l.b16 %v555
    %v704 = vunpack.c.l.b16 %v556
    %v705 = vunpack.c.l.b16 %v557
    %v706 = vunpack.c.l.b16 %v558
    %v707 = vunpack.c.l.b16 %v559
    %v708 = vunpack.c.l.b16 %v560
    %v709 = vunpack.c.l.b16 %v561
    %v710 = vpack.c.b16 %v695, %v694
    %v711 = vpack.c.b16 %v697, %v696
    %v712 = vpack.c.b16 %v699, %v698
    %v713 = vpack.c.b16 %v701, %v700
    %v714 = vpack.c.b16 %v703, %v702
    %v715 = vpack.c.b16 %v705, %v704
    %v716 = vpack.c.b16 %v707, %v706
    %v717 = vpack.c.b16 %v709, %v708
    %726 = vmatprep.subr.bf16.mxu0 0
    %727 = vmatpush1.bf16.msra.mxu0 %v717
    %728 = vmatprep.subr.bf16.mxu0 0
    %729 = vmatpush1.bf16.msra.mxu0 %v716
    %730 = vmatprep.subr.bf16.mxu0 0
    %731 = vmatpush1.bf16.msra.mxu0 %v715
    %732 = vmatprep.subr.bf16.mxu0 0
    %733 = vmatpush1.bf16.msra.mxu0 %v714
    %734 = vmatprep.subr.bf16.mxu0 0
    %735 = vmatpush1.bf16.msra.mxu0 %v713
    %736 = vmatprep.subr.bf16.mxu0 0
    %737 = vmatpush1.bf16.msra.mxu0 %v712
    %738 = vmatprep.subr.bf16.mxu0 0
    %739 = vmatpush1.bf16.msra.mxu0 %v711
    %740 = vmatprep.subr.bf16.mxu0 0
    %741 = vmatpush1.bf16.msra.mxu0 %v710
    %742 = vmatprep.subr.bf16.mxu0 0
    %743 = vmatpush2.bf16.msra.mxu0 0
    %744 = vmatprep.subr.bf16.mxu0 0
    %745 = vmatpush2.bf16.msra.mxu0 0
    %746 = vmatprep.subr.bf16.mxu0 0
    %747 = vmatpush2.bf16.msra.mxu0 0
    %748 = vmatprep.subr.bf16.mxu0 0
    %749 = vmatpush2.bf16.msra.mxu0 0
    %750 = vmatprep.subr.bf16.mxu0 0
    %751 = vmatpush2.bf16.msra.mxu0 0
    %752 = vmatprep.subr.bf16.mxu0 0
    %753 = vmatpush2.bf16.msra.mxu0 0
    %754 = vmatprep.subr.bf16.mxu0 0
    %755 = vmatpush2.bf16.msra.mxu0 0
    %756 = vmatprep.subr.bf16.mxu0 0
    %757 = vmatpush2.bf16.msra.mxu0 0
    %758 = vmatprep.mubr.bf16.mxu0 0
    %759 = vmatmul.mubr.bf16.gmra.mxu0 %v544
    %v760 = vpop.f32.mrf.mxu0
    %v761 = vadd.f32 %v664, %v760
    %v762 = vpop.f32.mrf.mxu0
    %v763 = vpop.f32.mrf.mxu0
    %v764 = vadd.f32 %v667, %v763
    %v765 = vpop.f32.mrf.mxu0
    %766 = vmatprep.mubr.bf16.mxu0 0
    %767 = vmatmul.mubr.bf16.gmra.mxu0 %v545
    %v768 = vpop.f32.mrf.mxu0
    %v769 = vadd.f32 %v672, %v768
    %v770 = vpop.f32.mrf.mxu0
    %v771 = vpop.f32.mrf.mxu0
    %v772 = vadd.f32 %v675, %v771
    %v773 = vpop.f32.mrf.mxu0
    %774 = vdwg.mxu0
    %v775 = vpack.c.bf16 %v541, %v540
    %v776 = vpack.c.bf16 %v543, %v542
    %s777 = scalar_lea.vmem [#allocation7], 128
    %v778 = vld [vmem:[%s777] sm:$0xf]
    %v779 = vld [vmem:[%s777 + $0x4] sm:$0xf]
    %v780 = vld [vmem:[%s777 + $0x8] sm:$0xf]
    %v781 = vld [vmem:[%s777 + $0xc] sm:$0xf]
    %v782 = vld [vmem:[%s777 + $0x10] sm:$0xf]
    %v783 = vld [vmem:[%s777 + $0x14] sm:$0xf]
    %v784 = vld [vmem:[%s777 + $0x18] sm:$0xf]
    %v785 = vld [vmem:[%s777 + $0x1c] sm:$0xf]
    %v786 = vld [vmem:[%s777 + $0x20] sm:$0xf]
    %v787 = vld [vmem:[%s777 + $0x24] sm:$0xf]
    %v788 = vld [vmem:[%s777 + $0x28] sm:$0xf]
    %v789 = vld [vmem:[%s777 + $0x2c] sm:$0xf]
    %v790 = vld [vmem:[%s777 + $0x30] sm:$0xf]
    %v791 = vld [vmem:[%s777 + $0x34] sm:$0xf]
    %v792 = vld [vmem:[%s777 + $0x38] sm:$0xf]
    %v793 = vld [vmem:[%s777 + $0x3c] sm:$0xf]
    %v810 = vunpack.c.l.b16 %v778
    %v811 = vunpack.c.l.b16 %v779
    %v812 = vunpack.c.l.b16 %v780
    %v813 = vunpack.c.l.b16 %v781
    %v814 = vunpack.c.l.b16 %v782
    %v815 = vunpack.c.l.b16 %v783
    %v816 = vunpack.c.l.b16 %v784
    %v817 = vunpack.c.l.b16 %v785
    %v818 = vunpack.c.l.b16 %v786
    %v819 = vunpack.c.l.b16 %v787
    %v820 = vunpack.c.l.b16 %v788
    %v821 = vunpack.c.l.b16 %v789
    %v822 = vunpack.c.l.b16 %v790
    %v823 = vunpack.c.l.b16 %v791
    %v824 = vunpack.c.l.b16 %v792
    %v825 = vunpack.c.l.b16 %v793
    %v826 = vpack.c.b16 %v811, %v810
    %v827 = vpack.c.b16 %v813, %v812
    %v828 = vpack.c.b16 %v815, %v814
    %v829 = vpack.c.b16 %v817, %v816
    %v830 = vpack.c.b16 %v819, %v818
    %v831 = vpack.c.b16 %v821, %v820
    %v832 = vpack.c.b16 %v823, %v822
    %v833 = vpack.c.b16 %v825, %v824
    %842 = vmatprep.subr.bf16.mxu0 0
    %843 = vmatpush1.bf16.msra.mxu0 %v833
    %844 = vmatprep.subr.bf16.mxu0 0
    %845 = vmatpush1.bf16.msra.mxu0 %v832
    %846 = vmatprep.subr.bf16.mxu0 0
    %847 = vmatpush1.bf16.msra.mxu0 %v831
    %848 = vmatprep.subr.bf16.mxu0 0
    %849 = vmatpush1.bf16.msra.mxu0 %v830
    %850 = vmatprep.subr.bf16.mxu0 0
    %851 = vmatpush1.bf16.msra.mxu0 %v829
    %852 = vmatprep.subr.bf16.mxu0 0
    %853 = vmatpush1.bf16.msra.mxu0 %v828
    %854 = vmatprep.subr.bf16.mxu0 0
    %855 = vmatpush1.bf16.msra.mxu0 %v827
    %856 = vmatprep.subr.bf16.mxu0 0
    %857 = vmatpush1.bf16.msra.mxu0 %v826
    %858 = vmatprep.subr.bf16.mxu0 0
    %859 = vmatpush2.bf16.msra.mxu0 0
    %860 = vmatprep.subr.bf16.mxu0 0
    %861 = vmatpush2.bf16.msra.mxu0 0
    %862 = vmatprep.subr.bf16.mxu0 0
    %863 = vmatpush2.bf16.msra.mxu0 0
    %864 = vmatprep.subr.bf16.mxu0 0
    %865 = vmatpush2.bf16.msra.mxu0 0
    %866 = vmatprep.subr.bf16.mxu0 0
    %867 = vmatpush2.bf16.msra.mxu0 0
    %868 = vmatprep.subr.bf16.mxu0 0
    %869 = vmatpush2.bf16.msra.mxu0 0
    %870 = vmatprep.subr.bf16.mxu0 0
    %871 = vmatpush2.bf16.msra.mxu0 0
    %872 = vmatprep.subr.bf16.mxu0 0
    %873 = vmatpush2.bf16.msra.mxu0 0
    %874 = vmatprep.mubr.bf16.mxu0 0
    %875 = vmatmul.mubr.bf16.gmra.mxu0 %v775
    %v876 = vpop.f32.mrf.mxu0
    %v877 = vadd.f32 0.0, %v876
    %v878 = vpop.f32.mrf.mxu0
    %v879 = vpop.f32.mrf.mxu0
    %v880 = vadd.f32 0.0, %v879
    %v881 = vpop.f32.mrf.mxu0
    %882 = vmatprep.mubr.bf16.mxu0 0
    %883 = vmatmul.mubr.bf16.gmra.mxu0 %v776
    %v884 = vpop.f32.mrf.mxu0
    %v885 = vadd.f32 0.0, %v884
    %v886 = vpop.f32.mrf.mxu0
    %v887 = vpop.f32.mrf.mxu0
    %v888 = vadd.f32 0.0, %v887
    %v889 = vpop.f32.mrf.mxu0
    %890 = vdwg.mxu0
    %v891 = vadd.f32 %v761, %v877
    %v892 = vadd.f32 %v764, %v880
    %v893 = vadd.f32 %v769, %v885
    %v894 = vadd.f32 %v772, %v888
    %v895 = vld [vmem:[%s5] sm:$0x1]
    %v896 = vld [vmem:[%s6] sm:$0x1]
    %v897 = vadd.f32 %v891, %v892
    %v898 = vadd.f32 %v897, %v893
    %v899 = vadd.f32 %v898, %v894
    %v900 = vrot.slane %v899, 4
    %v901 = vadd.f32 %v899, %v900
    %v902 = vrot.slane %v901, 2
    %v903 = vadd.f32 %v901, %v902
    %v904 = vrot.slane %v903, 1
    %v905 = vadd.f32 %v903, %v904
    %906 = vrot.lane.b32.xlu0 %v905, 8
    %v907 = vpop.permute.xlu0 %906
    %v908 = vadd.f32 %v905, %v907
    %909 = vrot.lane.b32.xlu0 %v908, 16
    %v910 = vpop.permute.xlu0 %909
    %v911 = vadd.f32 %v908, %v910
    %912 = vrot.lane.b32.xlu0 %v911, 32
    %v913 = vpop.permute.xlu0 %912
    %v914 = vadd.f32 %v911, %v913
    %915 = vrot.lane.b32.xlu0 %v914, 64
    %v916 = vpop.permute.xlu0 %915
    %v917 = vadd.f32 %v914, %v916
    %v918 = vmul.f32 %v917, 0.001953125
    %v919 = vlaneseq
    %v920 = vshrl.u32 %v919, 7
    %v921 = vsub.s32 0, %v920
    %v922 = vrot.slane %v918, %v921
    %v923 = vsub.f32 %v891, %v922
    %v924 = vsub.f32 %v892, %v922
    %v925 = vsub.f32 %v893, %v922
    %v926 = vsub.f32 %v894, %v922
    %v927 = vmul.f32 %v923, %v923
    %v928 = vmul.f32 %v924, %v924
    %v929 = vmul.f32 %v925, %v925
    %v930 = vmul.f32 %v926, %v926
    %v931 = vadd.f32 %v927, %v928
    %v932 = vadd.f32 %v931, %v929
    %v933 = vadd.f32 %v932, %v930
    %v934 = vrot.slane %v933, 4
    %v935 = vadd.f32 %v933, %v934
    %v936 = vrot.slane %v935, 2
    %v937 = vadd.f32 %v935, %v936
    %v938 = vrot.slane %v937, 1
    %v939 = vadd.f32 %v937, %v938
    %940 = vrot.lane.b32.xlu0 %v939, 8
    %v941 = vpop.permute.xlu0 %940
    %v942 = vadd.f32 %v939, %v941
    %943 = vrot.lane.b32.xlu0 %v942, 16
    %v944 = vpop.permute.xlu0 %943
    %v945 = vadd.f32 %v942, %v944
    %946 = vrot.lane.b32.xlu0 %v945, 32
    %v947 = vpop.permute.xlu0 %946
    %v948 = vadd.f32 %v945, %v947
    %949 = vrot.lane.b32.xlu0 %v948, 64
    %v950 = vpop.permute.xlu0 %949
    %v951 = vadd.f32 %v948, %v950
    %v952 = vmul.f32 %v951, 0.001953125
    %v953 = vadd.f32 %v952, 1e-05
    %v954 = vrsqrt.pop %v953
    %v955 = vmul.f32 %v895, %v954
    %v957 = vlaneseq
    %v958 = vshrl.u32 %v957, 7
    %v959 = vsub.s32 0, %v958
    %v960 = vrot.slane %v955, %v959
    %v962 = vmul.f32 %v923, %v960
    %v963 = vmul.f32 %v924, %v960
    %v964 = vmul.f32 %v925, %v960
    %v965 = vmul.f32 %v926, %v960
    %v967 = vlaneseq
    %v968 = vshrl.u32 %v967, 7
    %v969 = vsub.s32 0, %v968
    %v970 = vrot.slane %v896, %v969
    %v972 = vadd.f32 %v962, %v970
    %v973 = vadd.f32 %v963, %v970
    %v974 = vadd.f32 %v964, %v970
    %v975 = vadd.f32 %v965, %v970
    %v976 = vmax.f32 %v972, 0.0
    %v977 = vmax.f32 %v973, 0.0
    %v978 = vmax.f32 %v974, 0.0
    %v979 = vmax.f32 %v975, 0.0
    %v980 = vrot.slane %v976, 1
    %v981 = vrot.slane %v977, 1
    %v982 = vrot.slane %v978, 1
    %v983 = vrot.slane %v979, 1
    %v984 = vsel %vm152, %v982, %v983
    %v985 = vsel %vm152, %v981, %v982
    %v986 = vsel %vm152, %v980, %v981
    %v987 = vsel %vm152, %v983, %v980
    %v988 = vmax.f32 %v976, %v986
    %v989 = vmax.f32 %v977, %v985
    %v990 = vmax.f32 %v978, %v984
    %v991 = vmax.f32 %v979, %v987
    %v992 = vlaneseq
    %v993 = vand.u32 %v992, 127
    %v994 = vmul.u32 %v87, 2
    %v995 = vmul.u32 %v88, 2
    %vm996 = vcmp.eq.s32.totalorder %v993, %v994
    %vm997 = vcmp.eq.s32.totalorder %v993, %v995
    %v998 = vsel %vm996, 1, 0
    %v999 = vsel %vm997, 1, 0
    %v1000 = vcvt.s32.f32 %v998
    %v1001 = vcvt.s32.f32 %v999
    %v1002 = vpack.c.bf16 %v1001, %v1000
    %v1003 = vpack.c.bf16 %v989, %v988
    %v1004 = vpack.c.bf16 %v991, %v990
    %vm1005 = vcmask 261120
    %v1007 = vsel %vm1005, %v1002, 0
    %1009 = vmatprep.subr.bf16.mxu0 0
    %1010 = vmatpush1.bf16.msra.mxu0 0
    %1011 = vmatprep.subr.bf16.mxu0 0
    %1012 = vmatpush1.bf16.msra.mxu0 0
    %1013 = vmatprep.subr.bf16.mxu0 0
    %1014 = vmatpush1.bf16.msra.mxu0 0
    %1015 = vmatprep.subr.bf16.mxu0 0
    %1016 = vmatpush1.bf16.msra.mxu0 0
    %1017 = vmatprep.subr.bf16.mxu0 0
    %1018 = vmatpush1.bf16.msra.mxu0 0
    %1019 = vmatprep.subr.bf16.mxu0 0
    %1020 = vmatpush1.bf16.msra.mxu0 0
    %1021 = vmatprep.subr.bf16.mxu0 0
    %1022 = vmatpush1.bf16.msra.mxu0 %v1004
    %1023 = vmatprep.subr.bf16.mxu0 0
    %1024 = vmatpush1.bf16.msra.mxu0 %v1003
    %1025 = vmatprep.subr.bf16.mxu0 0
    %1026 = vmatpush2.bf16.msra.mxu0 0
    %1027 = vmatprep.subr.bf16.mxu0 0
    %1028 = vmatpush2.bf16.msra.mxu0 0
    %1029 = vmatprep.subr.bf16.mxu0 0
    %1030 = vmatpush2.bf16.msra.mxu0 0
    %1031 = vmatprep.subr.bf16.mxu0 0
    %1032 = vmatpush2.bf16.msra.mxu0 0
    %1033 = vmatprep.subr.bf16.mxu0 0
    %1034 = vmatpush2.bf16.msra.mxu0 0
    %1035 = vmatprep.subr.bf16.mxu0 0
    %1036 = vmatpush2.bf16.msra.mxu0 0
    %1037 = vmatprep.subr.bf16.mxu0 0
    %1038 = vmatpush2.bf16.msra.mxu0 0
    %1039 = vmatprep.subr.bf16.mxu0 0
    %1040 = vmatpush2.bf16.msra.mxu0 0
    %1041 = vmatprep.mubr.bf16.mxu0 0
    %1042 = vmatmul.mubr.bf16.gmra.mxu0 %v1007
    %v1043 = vpop.f32.mrf.mxu0
    %v1044 = vadd.f32 0.0, %v1043
    %v1045 = vpop.f32.mrf.mxu0
    %v1046 = vpop.f32.mrf.mxu0
    %v1047 = vadd.f32 0.0, %v1046
    %v1048 = vpop.f32.mrf.mxu0
    %1049 = vdwg.mxu0
    %v1050 = vpack.c.bf16 %v1047, %v1044
    %v1051 = vld [vmem:[#allocation8] sm:$0xf]
    %v1052 = vld [vmem:[#allocation8 + $0x4] sm:$0xf]
    %v1053 = vld [vmem:[#allocation8 + $0x8] sm:$0xf]
    %v1054 = vld [vmem:[#allocation8 + $0xc] sm:$0xf]
    %v1055 = vld [vmem:[#allocation8 + $0x10] sm:$0xf]
    %v1056 = vld [vmem:[#allocation8 + $0x14] sm:$0xf]
    %v1057 = vld [vmem:[#allocation8 + $0x18] sm:$0xf]
    %v1058 = vld [vmem:[#allocation8 + $0x1c] sm:$0xf]
    %v1059 = vld [vmem:[#allocation8 + $0x20] sm:$0xf]
    %v1060 = vld [vmem:[#allocation8 + $0x24] sm:$0xf]
    %v1061 = vld [vmem:[#allocation8 + $0x28] sm:$0xf]
    %v1062 = vld [vmem:[#allocation8 + $0x2c] sm:$0xf]
    %v1063 = vld [vmem:[#allocation8 + $0x30] sm:$0xf]
    %v1064 = vld [vmem:[#allocation8 + $0x34] sm:$0xf]
    %v1065 = vld [vmem:[#allocation8 + $0x38] sm:$0xf]
    %v1066 = vld [vmem:[#allocation8 + $0x3c] sm:$0xf]
    %v1083 = vunpack.c.l.b16 %v1051
    %v1084 = vunpack.c.l.b16 %v1052
    %v1085 = vunpack.c.l.b16 %v1053
    %v1086 = vunpack.c.l.b16 %v1054
    %v1087 = vunpack.c.l.b16 %v1055
    %v1088 = vunpack.c.l.b16 %v1056
    %v1089 = vunpack.c.l.b16 %v1057
    %v1090 = vunpack.c.l.b16 %v1058
    %v1091 = vunpack.c.l.b16 %v1059
    %v1092 = vunpack.c.l.b16 %v1060
    %v1093 = vunpack.c.l.b16 %v1061
    %v1094 = vunpack.c.l.b16 %v1062
    %v1095 = vunpack.c.l.b16 %v1063
    %v1096 = vunpack.c.l.b16 %v1064
    %v1097 = vunpack.c.l.b16 %v1065
    %v1098 = vunpack.c.l.b16 %v1066
    %v1099 = vpack.c.b16 %v1084, %v1083
    %v1100 = vpack.c.b16 %v1086, %v1085
    %v1101 = vpack.c.b16 %v1088, %v1087
    %v1102 = vpack.c.b16 %v1090, %v1089
    %v1103 = vpack.c.b16 %v1092, %v1091
    %v1104 = vpack.c.b16 %v1094, %v1093
    %v1105 = vpack.c.b16 %v1096, %v1095
    %v1106 = vpack.c.b16 %v1098, %v1097
    %1115 = vmatprep.subr.bf16.mxu0 0
    %1116 = vmatpush1.bf16.msra.mxu0 %v1106
    %1117 = vmatprep.subr.bf16.mxu0 0
    %1118 = vmatpush1.bf16.msra.mxu0 %v1105
    %1119 = vmatprep.subr.bf16.mxu0 0
    %1120 = vmatpush1.bf16.msra.mxu0 %v1104
    %1121 = vmatprep.subr.bf16.mxu0 0
    %1122 = vmatpush1.bf16.msra.mxu0 %v1103
    %1123 = vmatprep.subr.bf16.mxu0 0
    %1124 = vmatpush1.bf16.msra.mxu0 %v1102
    %1125 = vmatprep.subr.bf16.mxu0 0
    %1126 = vmatpush1.bf16.msra.mxu0 %v1101
    %1127 = vmatprep.subr.bf16.mxu0 0
    %1128 = vmatpush1.bf16.msra.mxu0 %v1100
    %1129 = vmatprep.subr.bf16.mxu0 0
    %1130 = vmatpush1.bf16.msra.mxu0 %v1099
    %1131 = vmatprep.subr.bf16.mxu0 0
    %1132 = vmatpush2.bf16.msra.mxu0 0
    %1133 = vmatprep.subr.bf16.mxu0 0
    %1134 = vmatpush2.bf16.msra.mxu0 0
    %1135 = vmatprep.subr.bf16.mxu0 0
    %1136 = vmatpush2.bf16.msra.mxu0 0
    %1137 = vmatprep.subr.bf16.mxu0 0
    %1138 = vmatpush2.bf16.msra.mxu0 0
    %1139 = vmatprep.subr.bf16.mxu0 0
    %1140 = vmatpush2.bf16.msra.mxu0 0
    %1141 = vmatprep.subr.bf16.mxu0 0
    %1142 = vmatpush2.bf16.msra.mxu0 0
    %1143 = vmatprep.subr.bf16.mxu0 0
    %1144 = vmatpush2.bf16.msra.mxu0 0
    %1145 = vmatprep.subr.bf16.mxu0 0
    %1146 = vmatpush2.bf16.msra.mxu0 0
    %1147 = vmatprep.mubr.bf16.mxu0 0
    %1148 = vmatmul.mubr.bf16.gmra.mxu0 %v1050
    %v1149 = vpop.f32.mrf.mxu0
    %v1150 = vadd.f32 0.0, %v1149
    %v1151 = vpop.f32.mrf.mxu0
    %v1152 = vpop.f32.mrf.mxu0
    %v1153 = vadd.f32 0.0, %v1152
    %v1154 = vpop.f32.mrf.mxu0
    %1155 = vdwg.mxu0
    %1156 = vst [vmem:[#allocation10] sm:$0xff] %v1150
    %1157 = vst [vmem:[#allocation10 + $0x8] sm:$0xff] %v1153
    // Predicated region
    $region50: #{tpu_custom_call.1} parent=1 // pred_check
      _
    $region51: #{tpu_custom_call.1} parent=1 // pred_check_branch
      %1159 = sbr.rel (0) target = $region53
    $region52: #{tpu_custom_call.1} parent=1 // pred_region
      %s1161 = ssub.s32 256, 256
      %1162 = vsyncadd [#allocation4], %s1161
      %s1163 = sshll.u32 [#allocation10], 4
      %s1164 = int_to_ptr.vmem [resolvable:$true] %s1163
      %1169 = dma.vmem_to_hbm [thread:$0]  %s1164, 256, %s8, [#allocation4], 128, 128, 8
    $region53: #{tpu_custom_call.1} parent=1 // pred_fallthru
      _
    // Predicated region
    $region54: #{tpu_custom_call.1} parent=1 // pred_check
      _
    $region55: #{tpu_custom_call.1} parent=1 // pred_check_branch
      %1171 = sbr.rel (0) target = $region57
    $region56: #{tpu_custom_call.1} parent=1 // pred_region
      %1172 = dma.done [#allocation4], 256
    $region57: #{tpu_custom_call.1} parent=1 // pred_fallthru
      _
    %1173 = vsyncpa [#allocation3], 1
    %1174 = vsyncpa [#allocation6], 1
    %1175 = vsyncpa [#allocation9], 1
    %1176 = vsyncpa [#allocation4], 1

</llo_original>
